<compile_context>
chip_gen: v5e
topology: v5e:2x2
jax: 0.10.0
libtpu: 0.0.40
codegen_flags: <defaults>
</compile_context>

<pallas_src>
import jax
import jax.numpy as jnp
from jax.experimental import pallas as pl
from jax.experimental.pallas import tpu as pltpu

# fixed (non-trainable) module constants: rho, cp, time_reg
RHO = 0.997
CP = 4185.5
TIME_REG = 1.0 / 3600.0
HEAT_C = RHO * CP * TIME_REG


# ---------------------------------------------------------------------------
# wrapper-side constant prep: blocked linear-scan matrices from A_eff powers
# ---------------------------------------------------------------------------
def _build_scan_mats(Aeff, Bw, Ew, L):
    nx = Aeff.shape[0]
    nu = Bw.shape[1]
    nd = Ew.shape[1]
    eye = jnp.eye(nx, dtype=jnp.float32)

    def step(Ak, _):
        An = jnp.dot(Ak, Aeff, preferred_element_type=jnp.float32)
        return An, An

    _, Ppow = jax.lax.scan(step, eye, None, length=L)        # A^1 .. A^L
    P = jnp.concatenate([eye[None], Ppow], axis=0)           # (L+1, nx, nx), P[k] = A^k

    # Qx: column block t (t = 1..L) holds A^t                 -> (nx, L*nx)
    Qx = P[1:].transpose(1, 0, 2).reshape(nx, L * nx)

    # BuP[k] = Bw.T @ A^k,  EdP[k] = Ew.T @ A^k,  k = 0..L-1
    BuP = jnp.einsum("ij,kjl->kil", Bw.T.astype(jnp.float32), P[:L])   # (L, nu, nx)
    EdP = jnp.einsum("ij,kjl->kil", Ew.T.astype(jnp.float32), P[:L])   # (L, nd, nx)

    # lower-block-Toeplitz assembly: block (s, t) = *P[t-s] if t >= s else 0
    s_idx = jnp.arange(L)[:, None]
    t_idx = jnp.arange(L)[None, :]
    k = t_idx - s_idx
    valid = (k >= 0)[:, :, None, None]
    kc = jnp.clip(k, 0, L - 1)

    Qu = jnp.where(valid, BuP[kc], 0.0).transpose(0, 2, 1, 3).reshape(L * nu, L * nx)
    Qd = jnp.where(valid, EdP[kc], 0.0).transpose(0, 2, 1, 3).reshape(L * nd, L * nx)
    return Qx, Qu, Qd


# ---------------------------------------------------------------------------
# time-block-major (lane-dense) packing helpers
# ---------------------------------------------------------------------------
def _pack_time_major(a, n_chunks, L):
    # (T_pad, B, f) -> (n_chunks, B, L*f); lane block t holds features of local time t
    T_pad, B, f = a.shape
    return a.reshape(n_chunks, L, B, f).transpose(0, 2, 1, 3).reshape(n_chunks, B, L * f)


def _unpack_time_major(a, T, f):
    # (n_chunks, B, L*f) -> (T, B, f)
    n_chunks, B, Lf = a.shape
    L = Lf // f
    return a.reshape(n_chunks, B, L, f).transpose(0, 2, 1, 3).reshape(n_chunks * L, B, f)[:T]


# ---------------------------------------------------------------------------
# kernel
# ---------------------------------------------------------------------------
def _make_kernel(L, B, nu, nd, nx):
    Lnu, Lnd, Lnx = L * nu, L * nd, L * nx
    # lane offsets inside the packed input slab (all multiples of 128 when L % 32 == 0)
    o_m = 0
    o_dt = o_m + Lnu
    o_d = o_dt + Lnu
    o_xmin = o_d + Lnd
    o_xmax = o_xmin + Lnx
    o_umin = o_xmax + Lnx
    o_umax = o_umin + Lnu
    F = o_umax + Lnu

    def kernel(x0_ref, qx_ref, qu_ref, qd_ref, seq_ref,
               x_out, sxmin_out, sxmax_out, sumin_out, sumax_out,
               x_state):
        # one-time init of the recurrent state (persists across chunks)
        @pl.when(pl.program_id(0) == 0)
        def _():
            x_state[...] = x0_ref[...]

        seq = seq_ref[...]                                      # (B, F) lane-dense slab

        # heat flow for the whole chunk at once (one VPU pass, reused for the slacks)
        u = (seq[:, o_m:o_m + Lnu] * HEAT_C) * seq[:, o_dt:o_dt + Lnu]   # (B, L*nu)
        d = seq[:, o_d:o_d + Lnd]                                        # (B, L*nd)

        # blocked linear scan: all L states of this chunk in three GEMMs,
        # no serial per-step dependence chain.
        X = (jnp.dot(x_state[...], qx_ref[...], preferred_element_type=jnp.float32)
             + jnp.dot(u, qu_ref[...], preferred_element_type=jnp.float32)
             + jnp.dot(d, qd_ref[...], preferred_element_type=jnp.float32))  # (B, L*nx)

        # carry x_L to the next chunk
        x_state[...] = X[:, Lnx - nx:]

        # lane-dense stores (last dims are L*nx / L*nu, multiples of 128)
        x_out[...] = X
        sxmin_out[...] = jnp.maximum(seq[:, o_xmin:o_xmin + Lnx] - X, 0.0)
        sxmax_out[...] = jnp.maximum(X - seq[:, o_xmax:o_xmax + Lnx], 0.0)
        sumin_out[...] = jnp.maximum(seq[:, o_umin:o_umin + Lnu] - u, 0.0)
        sumax_out[...] = jnp.maximum(u - seq[:, o_umax:o_umax + Lnu], 0.0)

    return kernel, F


# ---------------------------------------------------------------------------
# forward wrapper
# ---------------------------------------------------------------------------
def ssm_white_con_forward(x0, M_flow, DT, D, XMIN, XMAX, UMIN, UMAX,
                          Aw, As, Bw, Ew, *, t_chunk=64):
    """Pallas forward of SSM_white_con.

    Returns (X, Y, Sx_min, Sx_max, Su_min, Su_max) with shapes
    ((T,B,nx), (T,B), (T,B,nx), (T,B,nx), (T,B,nu), (T,B,nu)).
    """
    T, B, nu = M_flow.shape
    nd = D.shape[2]
    nx = x0.shape[1]

    # ---- per-call constant prep (glue, hoisted out of the kernel) -----------
    Aeff = ((1.0 - 0.1 * jax.nn.sigmoid(As)) * jax.nn.softmax(Aw, axis=1)).T  # (nx, nx)

    # chunk selection: keep L a multiple of 32 when possible (128-aligned lane
    # slices) and <= 256 so the Q matrices stay small on v7x's 64 MiB VMEM.
    L = min(t_chunk, T)
    n_chunks = pl.cdiv(T, L)
    T_pad = n_chunks * L
    Lnu, Lnx = L * nu, L * nx

    Qx, Qu, Qd = _build_scan_mats(Aeff, Bw, Ew, L)

    # ---- pack all per-step sequences into one lane-dense operand ------------
    def pad(a):
        return jnp.pad(a, ((0, T_pad - T), (0, 0), (0, 0))) if T_pad != T else a

    packed = [_pack_time_major(pad(a).astype(jnp.float32), n_chunks, L)
              for a in (M_flow, DT, D, XMIN, XMAX, UMIN, UMAX)]
    seq = jnp.concatenate(packed, axis=-1)                    # (n_chunks, B, F)
    F = seq.shape[-1]

    kernel, f_total = _make_kernel(L, B, nu, nd, nx)
    assert f_total == F

    grid_spec = pltpu.PrefetchScalarGridSpec(
        num_scalar_prefetch=0,
        grid=(n_chunks,),
        in_specs=[
            pl.BlockSpec((B, nx), lambda c: (0, 0)),               # x0
            pl.BlockSpec((nx, Lnx), lambda c: (0, 0)),             # Qx (A powers)
            pl.BlockSpec((Lnu, Lnx), lambda c: (0, 0)),            # Qu (Bw.T @ A^k blocks)
            pl.BlockSpec((L * nd, Lnx), lambda c: (0, 0)),         # Qd (Ew.T @ A^k blocks)
            pl.BlockSpec((None, B, F), lambda c: (c, 0, 0)),       # packed chunk
        ],
        out_specs=(
            pl.BlockSpec((None, B, Lnx), lambda c: (c, 0, 0)),     # X
            pl.BlockSpec((None, B, Lnx), lambda c: (c, 0, 0)),     # Sx_min
            pl.BlockSpec((None, B, Lnx), lambda c: (c, 0, 0)),     # Sx_max
            pl.BlockSpec((None, B, Lnu), lambda c: (c, 0, 0)),     # Su_min
            pl.BlockSpec((None, B, Lnu), lambda c: (c, 0, 0)),     # Su_max
        ),
        scratch_shapes=[pltpu.VMEM((B, nx), jnp.float32)],         # recurrent state
    )

    out_shape = (
        jax.ShapeDtypeStruct((n_chunks, B, Lnx), jnp.float32),
        jax.ShapeDtypeStruct((n_chunks, B, Lnx), jnp.float32),
        jax.ShapeDtypeStruct((n_chunks, B, Lnx), jnp.float32),
        jax.ShapeDtypeStruct((n_chunks, B, Lnu), jnp.float32),
        jax.ShapeDtypeStruct((n_chunks, B, Lnu), jnp.float32),
    )

    Xp, Sxminp, Sxmaxp, Suminp, Sumaxp = pl.pallas_call(
        kernel,
        grid_spec=grid_spec,
        out_shape=out_shape,
        compiler_params=pltpu.CompilerParams(
            dimension_semantics=("arbitrary",),     # sequential recurrence over chunks
            vmem_limit_bytes=32 * 1024 * 1024,      # safe on v5e/v6e/v7x at these sizes
        ),
    )(x0.astype(jnp.float32), Qx, Qu, Qd, seq)

    X = _unpack_time_major(Xp, T, nx)
    Sxmin = _unpack_time_major(Sxminp, T, nx)
    Sxmax = _unpack_time_major(Sxmaxp, T, nx)
    Sumin = _unpack_time_major(Suminp, T, nu)
    Sumax = _unpack_time_major(Sumaxp, T, nu)
    Y = X[:, :, -1]                                  # glue: per-step x[:, -1]
    return X, Y, Sxmin, Sxmax, Sumin, Sumax


# ---------------------------------------------------------------------------
# pure-JAX reference (mirrors the PyTorch forward step-by-step)
# ---------------------------------------------------------------------------
def ssm_white_con_reference(x0, M_flow, DT, D, XMIN, XMAX, UMIN, UMAX,
                            Aw, As, Bw, Ew):
    Aeff = ((1.0 - 0.1 * jax.nn.sigmoid(As)) * jax.nn.softmax(Aw, axis=1)).T

    def step(x, inp):
        m, dT, d, xmin, xmax, umin, umax = inp
        u = m * RHO * CP * TIME_REG * dT
        x = (jnp.dot(x, Aeff, preferred_element_type=jnp.float32)
             + jnp.dot(u, Bw.T, preferred_element_type=jnp.float32)
             + jnp.dot(d, Ew.T, preferred_element_type=jnp.float32))
        outs = (x, x[:, -1],
                jnp.maximum(xmin - x, 0.0), jnp.maximum(x - xmax, 0.0),
                jnp.maximum(umin - u, 0.0), jnp.maximum(u - umax, 0.0))
        return x, outs

    _, (X, Y, Sxmin, Sxmax, Sumin, Sumax) = jax.lax.scan(
        step, x0, (M_flow, DT, D, XMIN, XMAX, UMIN, UMAX))
    return X, Y, Sxmin, Sxmax, Sumin, Sumax


if __name__ == "__main__":
    # small, forward-consistent sizes; heat_flow is elementwise so n_m == n_dT == nu
    T, B = 128, 4
    nx, nu, nd = 8, 4, 4
    # n_hidden = 32  (declared by the module __init__ but unused in forward)

    key = jax.random.PRNGKey(0)
    ks = jax.random.split(key, 12)

    # deterministic parameter init (shapes from the module __init__)
    Aw = jax.random.uniform(ks[0], (nx, nx), jnp.float32)         # A.weight ~ torch.rand
    As = jax.random.uniform(ks[1], (nx, nx), jnp.float32)         # A.scalar ~ torch.rand
    Bw = jax.random.normal(ks[2], (nx, nu), jnp.float32) * 0.3    # B.weight (bias=False)
    Ew = jax.random.normal(ks[3], (nx, nd), jnp.float32) * 0.3    # E.weight (bias=False)

    # deterministic inputs
    x0 = jax.random.normal(ks[4], (B, nx), jnp.float32)
    M_flow = jax.random.uniform(ks[5], (T, B, nu), jnp.float32)   # mass flows >= 0
    DT = jax.random.normal(ks[6], (T, B, nu), jnp.float32)
    D = jax.random.normal(ks[7], (T, B, nd), jnp.float32)
    XMIN = jax.random.normal(ks[8], (T, B, nx), jnp.float32) - 1.0
    XMAX = jax.random.normal(ks[9], (T, B, nx), jnp.float32) + 1.0
    UMIN = jax.random.normal(ks[10], (T, B, nu), jnp.float32) - 1.0
    UMAX = jax.random.normal(ks[11], (T, B, nu), jnp.float32) + 1.0

    fwd = jax.jit(ssm_white_con_forward)
    outs = fwd(x0, M_flow, DT, D, XMIN, XMAX, UMIN, UMAX, Aw, As, Bw, Ew)
    jax.block_until_ready(outs)

    refs = jax.jit(ssm_white_con_reference)(
        x0, M_flow, DT, D, XMIN, XMAX, UMIN, UMAX, Aw, As, Bw, Ew)
    jax.block_until_ready(refs)

    X, Y = outs[0], outs[1]
    assert X.shape == (T, B, nx) and Y.shape == (T, B)
    names = ["X", "Y", "Sx_min", "Sx_max", "Su_min", "Su_max"]
    for name, o, r in zip(names, outs, refs):
        assert o.shape == r.shape, (name, o.shape, r.shape)
        # block-scan reorders f32 accumulation vs. the step-by-step reference;
        # A_eff is contractive so differences stay tiny.
        assert jnp.allclose(o, r, rtol=2e-4, atol=2e-4), name

    print("KERNEL_OK")
</pallas_src>

<mosaic_0001>
module attributes {stable_mosaic.version = 11 : i64} {
  func.func @kernel(%arg0: i32, %arg1: memref<4x8xf32, #tpu.memory_space<vmem>>, %arg2: memref<8x512xf32, #tpu.memory_space<vmem>>, %arg3: memref<256x512xf32, #tpu.memory_space<vmem>>, %arg4: memref<256x512xf32, #tpu.memory_space<vmem>>, %arg5: memref<1x4x2304xf32, #tpu.memory_space<vmem>>, %arg6: memref<1x4x512xf32, #tpu.memory_space<vmem>>, %arg7: memref<1x4x512xf32, #tpu.memory_space<vmem>>, %arg8: memref<1x4x512xf32, #tpu.memory_space<vmem>>, %arg9: memref<1x4x256xf32, #tpu.memory_space<vmem>>, %arg10: memref<1x4x256xf32, #tpu.memory_space<vmem>>, %arg11: memref<4x8xf32, #tpu.memory_space<vmem>>) attributes {dimension_semantics = [#tpu.dimension_semantics<arbitrary>], iteration_bounds = array<i64: 2>, scalar_prefetch = 0 : i64, scratch_operands = 1 : i64, tpu.core_type = #tpu.core_type<tc>, window_params = [{pipeline_mode = #tpu.pipeline_mode<synchronous>, transform_indices = @transform_0, window_bounds = array<i64: 4, 8>}, {pipeline_mode = #tpu.pipeline_mode<synchronous>, transform_indices = @transform_1, window_bounds = array<i64: 8, 512>}, {pipeline_mode = #tpu.pipeline_mode<synchronous>, transform_indices = @transform_2, window_bounds = array<i64: 256, 512>}, {pipeline_mode = #tpu.pipeline_mode<synchronous>, transform_indices = @transform_3, window_bounds = array<i64: 256, 512>}, {transform_indices = @transform_4, window_bounds = array<i64: 1, 4, 2304>}, {transform_indices = @transform_5, window_bounds = array<i64: 1, 4, 512>}, {transform_indices = @transform_6, window_bounds = array<i64: 1, 4, 512>}, {transform_indices = @transform_7, window_bounds = array<i64: 1, 4, 512>}, {transform_indices = @transform_8, window_bounds = array<i64: 1, 4, 256>}, {transform_indices = @transform_9, window_bounds = array<i64: 1, 4, 256>}]} {
    %c0_i32 = arith.constant 0 : i32
    %0 = arith.cmpi eq, %arg0, %c0_i32 : i32
    %1 = arith.extui %0 : i1 to i32
    %c0_i32_0 = arith.constant 0 : i32
    %2 = arith.cmpi ne, %1, %c0_i32_0 : i32
    scf.if %2 {
      %c0_35 = arith.constant 0 : index
      %c0_36 = arith.constant 0 : index
      %53 = vector.load %arg1[%c0_35, %c0_36] : memref<4x8xf32, #tpu.memory_space<vmem>>, vector<4x8xf32>
      %c0_37 = arith.constant 0 : index
      %c0_38 = arith.constant 0 : index
      %54 = vector.load %arg11[%c0_37, %c0_38] : memref<4x8xf32, #tpu.memory_space<vmem>>, vector<4x8xf32>
      tpu.vector_store %arg11[%c0_37, %c0_38], %53 {strides = array<i32>} : memref<4x8xf32, #tpu.memory_space<vmem>>, vector<4x8xf32>,
    } else {
    }
    %c0 = arith.constant 0 : index
    %c0_1 = arith.constant 0 : index
    %c0_2 = arith.constant 0 : index
    %3 = vector.load %arg5[%c0, %c0_1, %c0_2] : memref<1x4x2304xf32, #tpu.memory_space<vmem>>, vector<1x4x2304xf32>
    %4 = vector.shape_cast %3 : vector<1x4x2304xf32> to vector<4x2304xf32>
    %5 = vector.extract_strided_slice %4 {offsets = [0, 0], sizes = [4, 256], strides = [1, 1]} : vector<4x2304xf32> to vector<4x256xf32>
    %cst = arith.constant 1.15915096 : f32
    %6 = vector.broadcast %cst : f32 to vector<4x256xf32>
    %7 = arith.mulf %5, %6 : vector<4x256xf32>
    %8 = vector.extract_strided_slice %4 {offsets = [0, 256], sizes = [4, 256], strides = [1, 1]} : vector<4x2304xf32> to vector<4x256xf32>
    %9 = arith.mulf %7, %8 : vector<4x256xf32>
    %10 = vector.extract_strided_slice %4 {offsets = [0, 512], sizes = [4, 256], strides = [1, 1]} : vector<4x2304xf32> to vector<4x256xf32>
    %c0_3 = arith.constant 0 : index
    %c0_4 = arith.constant 0 : index
    %11 = vector.load %arg11[%c0_3, %c0_4] : memref<4x8xf32, #tpu.memory_space<vmem>>, vector<4x8xf32>
    %c0_5 = arith.constant 0 : index
    %c0_6 = arith.constant 0 : index
    %12 = vector.load %arg2[%c0_5, %c0_6] : memref<8x512xf32, #tpu.memory_space<vmem>>, vector<8x512xf32>
    %cst_7 = arith.constant dense<0.000000e+00> : vector<4x512xf32>
    %13 = tpu.matmul %11, %12, %cst_7 {dimension_numbers = #tpu.dot_dimension_numbers<[1], [0], [0], [1], [0, 0, 1, 1], [], []>} : vector<4x8xf32>, vector<8x512xf32>, vector<4x512xf32> -> vector<4x512xf32>
    %c0_8 = arith.constant 0 : index
    %c0_9 = arith.constant 0 : index
    %14 = vector.load %arg3[%c0_8, %c0_9] : memref<256x512xf32, #tpu.memory_space<vmem>>, vector<256x512xf32>
    %cst_10 = arith.constant dense<0.000000e+00> : vector<4x512xf32>
    %15 = tpu.matmul %9, %14, %cst_10 {dimension_numbers = #tpu.dot_dimension_numbers<[1], [0], [0], [1], [0, 0, 1, 1], [], []>} : vector<4x256xf32>, vector<256x512xf32>, vector<4x512xf32> -> vector<4x512xf32>
    %16 = arith.addf %13, %15 : vector<4x512xf32>
    %c0_11 = arith.constant 0 : index
    %c0_12 = arith.constant 0 : index
    %17 = vector.load %arg4[%c0_11, %c0_12] : memref<256x512xf32, #tpu.memory_space<vmem>>, vector<256x512xf32>
    %cst_13 = arith.constant dense<0.000000e+00> : vector<4x512xf32>
    %18 = tpu.matmul %10, %17, %cst_13 {dimension_numbers = #tpu.dot_dimension_numbers<[1], [0], [0], [1], [0, 0, 1, 1], [], []>} : vector<4x256xf32>, vector<256x512xf32>, vector<4x512xf32> -> vector<4x512xf32>
    %19 = arith.addf %16, %18 : vector<4x512xf32>
    %20 = vector.extract_strided_slice %19 {offsets = [0, 504], sizes = [4, 8], strides = [1, 1]} : vector<4x512xf32> to vector<4x8xf32>
    %c0_14 = arith.constant 0 : index
    %c0_15 = arith.constant 0 : index
    %21 = vector.load %arg11[%c0_14, %c0_15] : memref<4x8xf32, #tpu.memory_space<vmem>>, vector<4x8xf32>
    tpu.vector_store %arg11[%c0_14, %c0_15], %20 {strides = array<i32>} : memref<4x8xf32, #tpu.memory_space<vmem>>, vector<4x8xf32>,
    %c0_16 = arith.constant 0 : index
    %c0_17 = arith.constant 0 : index
    %c0_18 = arith.constant 0 : index
    %22 = vector.load %arg6[%c0_16, %c0_17, %c0_18] : memref<1x4x512xf32, #tpu.memory_space<vmem>>, vector<1x4x512xf32>
    %23 = vector.shape_cast %22 : vector<1x4x512xf32> to vector<4x512xf32>
    %24 = vector.shape_cast %19 : vector<4x512xf32> to vector<1x4x512xf32>
    tpu.vector_store %arg6[%c0_16, %c0_17, %c0_18], %24 {strides = array<i32>} : memref<1x4x512xf32, #tpu.memory_space<vmem>>, vector<1x4x512xf32>,
    %25 = vector.extract_strided_slice %4 {offsets = [0, 768], sizes = [4, 512], strides = [1, 1]} : vector<4x2304xf32> to vector<4x512xf32>
    %26 = arith.subf %25, %19 : vector<4x512xf32>
    %cst_19 = arith.constant 0.000000e+00 : f32
    %27 = vector.broadcast %cst_19 : f32 to vector<4x512xf32>
    %28 = arith.maximumf %26, %27 : vector<4x512xf32>
    %c0_20 = arith.constant 0 : index
    %c0_21 = arith.constant 0 : index
    %c0_22 = arith.constant 0 : index
    %29 = vector.load %arg7[%c0_20, %c0_21, %c0_22] : memref<1x4x512xf32, #tpu.memory_space<vmem>>, vector<1x4x512xf32>
    %30 = vector.shape_cast %29 : vector<1x4x512xf32> to vector<4x512xf32>
    %31 = vector.shape_cast %28 : vector<4x512xf32> to vector<1x4x512xf32>
    tpu.vector_store %arg7[%c0_20, %c0_21, %c0_22], %31 {strides = array<i32>} : memref<1x4x512xf32, #tpu.memory_space<vmem>>, vector<1x4x512xf32>,
    %32 = vector.extract_strided_slice %4 {offsets = [0, 1280], sizes = [4, 512], strides = [1, 1]} : vector<4x2304xf32> to vector<4x512xf32>
    %33 = arith.subf %19, %32 : vector<4x512xf32>
    %cst_23 = arith.constant 0.000000e+00 : f32
    %34 = vector.broadcast %cst_23 : f32 to vector<4x512xf32>
    %35 = arith.maximumf %33, %34 : vector<4x512xf32>
    %c0_24 = arith.constant 0 : index
    %c0_25 = arith.constant 0 : index
    %c0_26 = arith.constant 0 : index
    %36 = vector.load %arg8[%c0_24, %c0_25, %c0_26] : memref<1x4x512xf32, #tpu.memory_space<vmem>>, vector<1x4x512xf32>
    %37 = vector.shape_cast %36 : vector<1x4x512xf32> to vector<4x512xf32>
    %38 = vector.shape_cast %35 : vector<4x512xf32> to vector<1x4x512xf32>
    tpu.vector_store %arg8[%c0_24, %c0_25, %c0_26], %38 {strides = array<i32>} : memref<1x4x512xf32, #tpu.memory_space<vmem>>, vector<1x4x512xf32>,
    %39 = vector.extract_strided_slice %4 {offsets = [0, 1792], sizes = [4, 256], strides = [1, 1]} : vector<4x2304xf32> to vector<4x256xf32>
    %40 = arith.subf %39, %9 : vector<4x256xf32>
    %cst_27 = arith.constant 0.000000e+00 : f32
    %41 = vector.broadcast %cst_27 : f32 to vector<4x256xf32>
    %42 = arith.maximumf %40, %41 : vector<4x256xf32>
    %c0_28 = arith.constant 0 : index
    %c0_29 = arith.constant 0 : index
    %c0_30 = arith.constant 0 : index
    %43 = vector.load %arg9[%c0_28, %c0_29, %c0_30] : memref<1x4x256xf32, #tpu.memory_space<vmem>>, vector<1x4x256xf32>
    %44 = vector.shape_cast %43 : vector<1x4x256xf32> to vector<4x256xf32>
    %45 = vector.shape_cast %42 : vector<4x256xf32> to vector<1x4x256xf32>
    tpu.vector_store %arg9[%c0_28, %c0_29, %c0_30], %45 {strides = array<i32>} : memref<1x4x256xf32, #tpu.memory_space<vmem>>, vector<1x4x256xf32>,
    %46 = vector.extract_strided_slice %4 {offsets = [0, 2048], sizes = [4, 256], strides = [1, 1]} : vector<4x2304xf32> to vector<4x256xf32>
    %47 = arith.subf %9, %46 : vector<4x256xf32>
    %cst_31 = arith.constant 0.000000e+00 : f32
    %48 = vector.broadcast %cst_31 : f32 to vector<4x256xf32>
    %49 = arith.maximumf %47, %48 : vector<4x256xf32>
    %c0_32 = arith.constant 0 : index
    %c0_33 = arith.constant 0 : index
    %c0_34 = arith.constant 0 : index
    %50 = vector.load %arg10[%c0_32, %c0_33, %c0_34] : memref<1x4x256xf32, #tpu.memory_space<vmem>>, vector<1x4x256xf32>
    %51 = vector.shape_cast %50 : vector<1x4x256xf32> to vector<4x256xf32>
    %52 = vector.shape_cast %49 : vector<4x256xf32> to vector<1x4x256xf32>
    tpu.vector_store %arg10[%c0_32, %c0_33, %c0_34], %52 {strides = array<i32>} : memref<1x4x256xf32, #tpu.memory_space<vmem>>, vector<1x4x256xf32>,
    return
  }
  func.func @transform_0(%arg0: i32) -> (i32, i32) {
    %c0_i32 = arith.constant 0 : i32
    %c0_i32_0 = arith.constant 0 : i32
    %c0_i32_1 = arith.constant 0 : i32
    return %c0_i32, %c0_i32_0 : i32, i32
  }
  func.func @transform_1(%arg0: i32) -> (i32, i32) {
    %c0_i32 = arith.constant 0 : i32
    %c0_i32_0 = arith.constant 0 : i32
    %c0_i32_1 = arith.constant 0 : i32
    return %c0_i32, %c0_i32_0 : i32, i32
  }
  func.func @transform_2(%arg0: i32) -> (i32, i32) {
    %c0_i32 = arith.constant 0 : i32
    %c0_i32_0 = arith.constant 0 : i32
    %c0_i32_1 = arith.constant 0 : i32
    return %c0_i32, %c0_i32_0 : i32, i32
  }
  func.func @transform_3(%arg0: i32) -> (i32, i32) {
    %c0_i32 = arith.constant 0 : i32
    %c0_i32_0 = arith.constant 0 : i32
    %c0_i32_1 = arith.constant 0 : i32
    return %c0_i32, %c0_i32_0 : i32, i32
  }
  func.func @transform_4(%arg0: i32) -> (i32, i32, i32) {
    %c0_i32 = arith.constant 0 : i32
    %c0_i32_0 = arith.constant 0 : i32
    %c0_i32_1 = arith.constant 0 : i32
    return %arg0, %c0_i32, %c0_i32_0 : i32, i32, i32
  }
  func.func @transform_5(%arg0: i32) -> (i32, i32, i32) {
    %c0_i32 = arith.constant 0 : i32
    %c0_i32_0 = arith.constant 0 : i32
    %c0_i32_1 = arith.constant 0 : i32
    return %arg0, %c0_i32, %c0_i32_0 : i32, i32, i32
  }
  func.func @transform_6(%arg0: i32) -> (i32, i32, i32) {
    %c0_i32 = arith.constant 0 : i32
    %c0_i32_0 = arith.constant 0 : i32
    %c0_i32_1 = arith.constant 0 : i32
    return %arg0, %c0_i32, %c0_i32_0 : i32, i32, i32
  }
  func.func @transform_7(%arg0: i32) -> (i32, i32, i32) {
    %c0_i32 = arith.constant 0 : i32
    %c0_i32_0 = arith.constant 0 : i32
    %c0_i32_1 = arith.constant 0 : i32
    return %arg0, %c0_i32, %c0_i32_0 : i32, i32, i32
  }
  func.func @transform_8(%arg0: i32) -> (i32, i32, i32) {
    %c0_i32 = arith.constant 0 : i32
    %c0_i32_0 = arith.constant 0 : i32
    %c0_i32_1 = arith.constant 0 : i32
    return %arg0, %c0_i32, %c0_i32_0 : i32, i32, i32
  }
  func.func @transform_9(%arg0: i32) -> (i32, i32, i32) {
    %c0_i32 = arith.constant 0 : i32
    %c0_i32_0 = arith.constant 0 : i32
    %c0_i32_1 = arith.constant 0 : i32
    return %arg0, %c0_i32, %c0_i32_0 : i32, i32, i32
  }
}

</mosaic_0001>

<llo_original>
// kernel: custom-call.5
$region0: #{custom-call.5}
  %s0 = inlined_call_operand.vmem [shape: f32[64,8,8], index: 0, kind: output, shape index: {}]

// kernel: ssm_white_con_forward.1
$region0: #{ssm_white_con_forward.1}
  #allocation0 [shape = 'u32[]', space=smem, size = 0x4, offset = 0x4, fixed_abs, tag = 'smem constant byte address 0x4 - core index']
  #allocation1 [shape = 'u32[72,128]{1,0:T(1,128)}', space=vmem, size = 0x9000, scoped, tag = 'internal scratch']
  #allocation2 [shape = 'f32[4,8]{1,0:T(4,128)}', space=vmem, size = 0x800, scoped, tag = 'scratch operand']
  %s0 = inlined_call_operand.vmem [shape: f32[4,8], index: 0, kind: input, shape index: {}]
  %s1 = inlined_call_operand.vmem [shape: f32[8,512], index: 1, kind: input, shape index: {}]
  %s2 = inlined_call_operand.vmem [shape: f32[256,512], index: 2, kind: input, shape index: {}]
  %s3 = inlined_call_operand.vmem [shape: f32[256,512], index: 3, kind: input, shape index: {}]
  %s4 = inlined_call_operand.vmem [shape: f32[2,4,2304], index: 4, kind: input, shape index: {}]
  %s5 = inlined_call_operand.vmem [shape: f32[2,4,512], index: 5, kind: output, shape index: {0}]
  %s6 = inlined_call_operand.vmem [shape: f32[2,4,512], index: 6, kind: output, shape index: {1}]
  %s7 = inlined_call_operand.vmem [shape: f32[2,4,512], index: 7, kind: output, shape index: {2}]
  %s8 = inlined_call_operand.vmem [shape: f32[2,4,256], index: 8, kind: output, shape index: {3}]
  %s9 = inlined_call_operand.vmem [shape: f32[2,4,256], index: 9, kind: output, shape index: {4}]
  %10 = xla_tuple %s5, %s6, %s7, %s8, %s9
  %s11 = sld [smem:[#allocation0]]
  $region89: #{ssm_white_con_forward.1} parent=0
    _
  %s13 = ssub.s32 1, %s11
  %s14 = scalar_select 0, %s13, %s11
  loop: start=0, step=1, limit=4
  $region2: #{ssm_white_con_forward.1} parent=0 // loop_pre_header
    _
  $region3: #{ssm_white_con_forward.1} parent=0 // loop_header
    %s16 = sphi 0, %s20
    %p17 = scmp.ge.s32.totalorder %s16, 4
    %s24 = sphi 0, %s24
    %s26 = sphi 0, %s24
    %s27 = sphi 0, %s26
    %s41 = sphi 0, %s27
    %s45 = sphi 0, %s45
    %s47 = sphi 0, %s45
    %s48 = sphi 0, %s47
    %s62 = sphi 0, %s48
    %s66 = sphi 0, %s66
    %s68 = sphi 0, %s66
    %s69 = sphi 0, %s68
    %s83 = sphi 0, %s69
    %s87 = sphi 0, %s87
    %s89 = sphi 0, %s87
    %s90 = sphi 0, %s89
    %s104 = sphi 0, %s90
    %s110 = sphi 0, %s112
    %s113 = sphi 0, %s110
    %s114 = sphi 0, %s113
    %s130 = sphi 0, %s114
    %s136 = sphi 0, %s138
    %s139 = sphi 0, %s136
    %s140 = sphi 0, %s139
    %s156 = sphi 0, %s140
    %s162 = sphi 0, %s164
    %s165 = sphi 0, %s162
    %s166 = sphi 0, %s165
    %s182 = sphi 0, %s166
    %s188 = sphi 0, %s190
    %s191 = sphi 0, %s188
    %s192 = sphi 0, %s191
    %s208 = sphi 0, %s192
    %s214 = sphi 0, %s216
    %s217 = sphi 0, %s214
    %s218 = sphi 0, %s217
    %s234 = sphi 0, %s218
    %s240 = sphi 0, %s242
    %s243 = sphi 0, %s240
    %s244 = sphi 0, %s243
    %s260 = sphi 0, %s244
  $region4: #{ssm_white_con_forward.1} parent=0 // loop_header_branch
    %19 = sbr.rel (%p17) target = $region8
  $region5: #{ssm_white_con_forward.1} parent=0 // loop_body
    %s21 = ssub.s32 %s16, 1
    %s22 = ssub.s32 %s16, 2
    %s23 = sadd.s32 %s16, 1
    %s25 = sadd.s32 %s24, 1
    %p28 = scmp.eq.s32.totalorder %s16, 1
    %p29 = scmp.ne.s32.totalorder %s24, %s26
    %p30 = scmp.eq.s32.totalorder %s16, 0
    %p31 = por %p29, %p30
    %p32 = scmp.ne.s32.totalorder %s24, %s26
    %p33 = scmp.eq.s32.totalorder %s21, 1
    %p34 = por %p32, %p33
    %p35 = scmp.ne.s32.totalorder %s26, %s27
    %p36 = scmp.eq.s32.totalorder %s21, 0
    %p37 = por %p35, %p36
    %p38 = scmp.ne.s32.totalorder %s26, %s27
    %p39 = scmp.eq.s32.totalorder %s22, 1
    %p40 = por %p38, %p39
    %p42 = scmp.ne.s32.totalorder %s27, %s41
    %p43 = scmp.eq.s32.totalorder %s22, 0
    %p44 = por %p42, %p43
    %s46 = sadd.s32 %s45, 1
    %p49 = scmp.eq.s32.totalorder %s16, 1
    %p50 = scmp.ne.s32.totalorder %s45, %s47
    %p51 = scmp.eq.s32.totalorder %s16, 0
    %p52 = por %p50, %p51
    %p53 = scmp.ne.s32.totalorder %s45, %s47
    %p54 = scmp.eq.s32.totalorder %s21, 1
    %p55 = por %p53, %p54
    %p56 = scmp.ne.s32.totalorder %s47, %s48
    %p57 = scmp.eq.s32.totalorder %s21, 0
    %p58 = por %p56, %p57
    %p59 = scmp.ne.s32.totalorder %s47, %s48
    %p60 = scmp.eq.s32.totalorder %s22, 1
    %p61 = por %p59, %p60
    %p63 = scmp.ne.s32.totalorder %s48, %s62
    %p64 = scmp.eq.s32.totalorder %s22, 0
    %p65 = por %p63, %p64
    %s67 = sadd.s32 %s66, 1
    %p70 = scmp.eq.s32.totalorder %s16, 1
    %p71 = scmp.ne.s32.totalorder %s66, %s68
    %p72 = scmp.eq.s32.totalorder %s16, 0
    %p73 = por %p71, %p72
    %p74 = scmp.ne.s32.totalorder %s66, %s68
    %p75 = scmp.eq.s32.totalorder %s21, 1
    %p76 = por %p74, %p75
    %p77 = scmp.ne.s32.totalorder %s68, %s69
    %p78 = scmp.eq.s32.totalorder %s21, 0
    %p79 = por %p77, %p78
    %p80 = scmp.ne.s32.totalorder %s68, %s69
    %p81 = scmp.eq.s32.totalorder %s22, 1
    %p82 = por %p80, %p81
    %p84 = scmp.ne.s32.totalorder %s69, %s83
    %p85 = scmp.eq.s32.totalorder %s22, 0
    %p86 = por %p84, %p85
    %s88 = sadd.s32 %s87, 1
    %p91 = scmp.eq.s32.totalorder %s16, 1
    %p92 = scmp.ne.s32.totalorder %s87, %s89
    %p93 = scmp.eq.s32.totalorder %s16, 0
    %p94 = por %p92, %p93
    %p95 = scmp.ne.s32.totalorder %s87, %s89
    %p96 = scmp.eq.s32.totalorder %s21, 1
    %p97 = por %p95, %p96
    %p98 = scmp.ne.s32.totalorder %s89, %s90
    %p99 = scmp.eq.s32.totalorder %s21, 0
    %p100 = por %p98, %p99
    %p101 = scmp.ne.s32.totalorder %s89, %s90
    %p102 = scmp.eq.s32.totalorder %s22, 1
    %p103 = por %p101, %p102
    %p105 = scmp.ne.s32.totalorder %s90, %s104
    %p106 = scmp.eq.s32.totalorder %s22, 0
    %p107 = por %p105, %p106
    %s108 = ssub.s32 %s16, %s23
    %p109 = scmp.eq.s32.totalorder %s108, 0
    %s111 = sadd.s32 %s110, 1
    %s112 = scalar_select %p109, %s110, %s111
    %p115 = pneg %p109
    %p116 = scmp.eq.s32.totalorder %s16, 1
    %p117 = por %p115, %p116
    %p118 = scmp.ne.s32.totalorder %s110, %s113
    %p119 = scmp.eq.s32.totalorder %s16, 0
    %p120 = por %p118, %p119
    %p121 = scmp.ne.s32.totalorder %s110, %s113
    %p122 = scmp.eq.s32.totalorder %s21, 1
    %p123 = por %p121, %p122
    %p124 = scmp.ne.s32.totalorder %s113, %s114
    %p125 = scmp.eq.s32.totalorder %s21, 0
    %p126 = por %p124, %p125
    %p127 = scmp.ne.s32.totalorder %s113, %s114
    %p128 = scmp.eq.s32.totalorder %s22, 1
    %p129 = por %p127, %p128
    %p131 = scmp.ne.s32.totalorder %s114, %s130
    %p132 = scmp.eq.s32.totalorder %s22, 0
    %p133 = por %p131, %p132
    %s134 = ssub.s32 %s16, %s23
    %p135 = scmp.eq.s32.totalorder %s134, 0
    %s137 = sadd.s32 %s136, 1
    %s138 = scalar_select %p135, %s136, %s137
    %p141 = pneg %p135
    %p142 = scmp.eq.s32.totalorder %s16, 1
    %p143 = por %p141, %p142
    %p144 = scmp.ne.s32.totalorder %s136, %s139
    %p145 = scmp.eq.s32.totalorder %s16, 0
    %p146 = por %p144, %p145
    %p147 = scmp.ne.s32.totalorder %s136, %s139
    %p148 = scmp.eq.s32.totalorder %s21, 1
    %p149 = por %p147, %p148
    %p150 = scmp.ne.s32.totalorder %s139, %s140
    %p151 = scmp.eq.s32.totalorder %s21, 0
    %p152 = por %p150, %p151
    %p153 = scmp.ne.s32.totalorder %s139, %s140
    %p154 = scmp.eq.s32.totalorder %s22, 1
    %p155 = por %p153, %p154
    %p157 = scmp.ne.s32.totalorder %s140, %s156
    %p158 = scmp.eq.s32.totalorder %s22, 0
    %p159 = por %p157, %p158
    %s160 = ssub.s32 %s16, %s23
    %p161 = scmp.eq.s32.totalorder %s160, 0
    %s163 = sadd.s32 %s162, 1
    %s164 = scalar_select %p161, %s162, %s163
    %p167 = pneg %p161
    %p168 = scmp.eq.s32.totalorder %s16, 1
    %p169 = por %p167, %p168
    %p170 = scmp.ne.s32.totalorder %s162, %s165
    %p171 = scmp.eq.s32.totalorder %s16, 0
    %p172 = por %p170, %p171
    %p173 = scmp.ne.s32.totalorder %s162, %s165
    %p174 = scmp.eq.s32.totalorder %s21, 1
    %p175 = por %p173, %p174
    %p176 = scmp.ne.s32.totalorder %s165, %s166
    %p177 = scmp.eq.s32.totalorder %s21, 0
    %p178 = por %p176, %p177
    %p179 = scmp.ne.s32.totalorder %s165, %s166
    %p180 = scmp.eq.s32.totalorder %s22, 1
    %p181 = por %p179, %p180
    %p183 = scmp.ne.s32.totalorder %s166, %s182
    %p184 = scmp.eq.s32.totalorder %s22, 0
    %p185 = por %p183, %p184
    %s186 = ssub.s32 %s16, %s23
    %p187 = scmp.eq.s32.totalorder %s186, 0
    %s189 = sadd.s32 %s188, 1
    %s190 = scalar_select %p187, %s188, %s189
    %p193 = pneg %p187
    %p194 = scmp.eq.s32.totalorder %s16, 1
    %p195 = por %p193, %p194
    %p196 = scmp.ne.s32.totalorder %s188, %s191
    %p197 = scmp.eq.s32.totalorder %s16, 0
    %p198 = por %p196, %p197
    %p199 = scmp.ne.s32.totalorder %s188, %s191
    %p200 = scmp.eq.s32.totalorder %s21, 1
    %p201 = por %p199, %p200
    %p202 = scmp.ne.s32.totalorder %s191, %s192
    %p203 = scmp.eq.s32.totalorder %s21, 0
    %p204 = por %p202, %p203
    %p205 = scmp.ne.s32.totalorder %s191, %s192
    %p206 = scmp.eq.s32.totalorder %s22, 1
    %p207 = por %p205, %p206
    %p209 = scmp.ne.s32.totalorder %s192, %s208
    %p210 = scmp.eq.s32.totalorder %s22, 0
    %p211 = por %p209, %p210
    %s212 = ssub.s32 %s16, %s23
    %p213 = scmp.eq.s32.totalorder %s212, 0
    %s215 = sadd.s32 %s214, 1
    %s216 = scalar_select %p213, %s214, %s215
    %p219 = pneg %p213
    %p220 = scmp.eq.s32.totalorder %s16, 1
    %p221 = por %p219, %p220
    %p222 = scmp.ne.s32.totalorder %s214, %s217
    %p223 = scmp.eq.s32.totalorder %s16, 0
    %p224 = por %p222, %p223
    %p225 = scmp.ne.s32.totalorder %s214, %s217
    %p226 = scmp.eq.s32.totalorder %s21, 1
    %p227 = por %p225, %p226
    %p228 = scmp.ne.s32.totalorder %s217, %s218
    %p229 = scmp.eq.s32.totalorder %s21, 0
    %p230 = por %p228, %p229
    %p231 = scmp.ne.s32.totalorder %s217, %s218
    %p232 = scmp.eq.s32.totalorder %s22, 1
    %p233 = por %p231, %p232
    %p235 = scmp.ne.s32.totalorder %s218, %s234
    %p236 = scmp.eq.s32.totalorder %s22, 0
    %p237 = por %p235, %p236
    %s238 = ssub.s32 %s16, %s23
    %p239 = scmp.eq.s32.totalorder %s238, 0
    %s241 = sadd.s32 %s240, 1
    %s242 = scalar_select %p239, %s240, %s241
    %p245 = pneg %p239
    %p246 = scmp.eq.s32.totalorder %s16, 1
    %p247 = por %p245, %p246
    %p248 = scmp.ne.s32.totalorder %s240, %s243
    %p249 = scmp.eq.s32.totalorder %s16, 0
    %p250 = por %p248, %p249
    %p251 = scmp.ne.s32.totalorder %s240, %s243
    %p252 = scmp.eq.s32.totalorder %s21, 1
    %p253 = por %p251, %p252
    %p254 = scmp.ne.s32.totalorder %s243, %s244
    %p255 = scmp.eq.s32.totalorder %s21, 0
    %p256 = por %p254, %p255
    %p257 = scmp.ne.s32.totalorder %s243, %s244
    %p258 = scmp.eq.s32.totalorder %s22, 1
    %p259 = por %p257, %p258
    %p261 = scmp.ne.s32.totalorder %s244, %s260
    %p262 = scmp.eq.s32.totalorder %s22, 0
    %p263 = por %p261, %p262
    %p264 = scmp.le.s32.totalorder 1, %s16
    %p265 = scmp.lt.s32.totalorder %s16, 3
    %p266 = pnand %p264, %p265
    %p267 = pneg %p266
    // Predicated region
    $region9: #{ssm_white_con_forward.1} parent=5 // pred_check
      _
    $region10: #{ssm_white_con_forward.1} parent=5 // pred_check_branch
      %269 = sbr.rel (%p266) target = $region12
    $region11: #{ssm_white_con_forward.1} parent=5 // pred_region
      %s270 = ssub.s32 %s16, 1
      // Predicated region
      $region13: #{ssm_white_con_forward.1} parent=11 // pred_check
        %p271 = pneg %p37
      $region14: #{ssm_white_con_forward.1} parent=11 // pred_check_branch
        %273 = sbr.rel (%p271) target = $region16
      $region15: #{ssm_white_con_forward.1} parent=11 // pred_region
        _
      $region16: #{ssm_white_con_forward.1} parent=11 // pred_fallthru
        _
      // Predicated region
      $region17: #{ssm_white_con_forward.1} parent=11 // pred_check
        %p274 = pneg %p58
      $region18: #{ssm_white_con_forward.1} parent=11 // pred_check_branch
        %276 = sbr.rel (%p274) target = $region20
      $region19: #{ssm_white_con_forward.1} parent=11 // pred_region
        _
      $region20: #{ssm_white_con_forward.1} parent=11 // pred_fallthru
        _
      // Predicated region
      $region21: #{ssm_white_con_forward.1} parent=11 // pred_check
        %p277 = pneg %p79
      $region22: #{ssm_white_con_forward.1} parent=11 // pred_check_branch
        %279 = sbr.rel (%p277) target = $region24
      $region23: #{ssm_white_con_forward.1} parent=11 // pred_region
        _
      $region24: #{ssm_white_con_forward.1} parent=11 // pred_fallthru
        _
      // Predicated region
      $region25: #{ssm_white_con_forward.1} parent=11 // pred_check
        %p280 = pneg %p100
      $region26: #{ssm_white_con_forward.1} parent=11 // pred_check_branch
        %282 = sbr.rel (%p280) target = $region28
      $region27: #{ssm_white_con_forward.1} parent=11 // pred_region
        _
      $region28: #{ssm_white_con_forward.1} parent=11 // pred_fallthru
        _
    $region12: #{ssm_white_con_forward.1} parent=5 // pred_fallthru
      _
    %p283 = scmp.lt.s32.totalorder %s16, 2
    // Predicated region
    $region29: #{ssm_white_con_forward.1} parent=5 // pred_check
      %p284 = pneg %p283
    $region30: #{ssm_white_con_forward.1} parent=5 // pred_check_branch
      %286 = sbr.rel (%p284) target = $region32
    $region31: #{ssm_white_con_forward.1} parent=5 // pred_region
      // Predicated region
      $region33: #{ssm_white_con_forward.1} parent=31 // pred_check
        %p287 = pneg %p120
      $region34: #{ssm_white_con_forward.1} parent=31 // pred_check_branch
        %289 = sbr.rel (%p287) target = $region36
      $region35: #{ssm_white_con_forward.1} parent=31 // pred_region
        %p290 = scmp.lt.s32.totalorder %s16, 1
        %s291 = scalar_select %p290, %s16, 1
        %s292 = smul.addr %s291, 18
        %s293 = smul.addr %s292, 4
        %s294 = scalar_lea.vmem %s4, %s293
      $region36: #{ssm_white_con_forward.1} parent=31 // pred_fallthru
        _
    $region32: #{ssm_white_con_forward.1} parent=5 // pred_fallthru
      _
    %p295 = scmp.le.s32.totalorder 1, %s16
    %p296 = scmp.lt.s32.totalorder %s16, 3
    %p297 = pnand %p295, %p296
    %p298 = pneg %p297
    // Predicated region
    $region37: #{ssm_white_con_forward.1} parent=5 // pred_check
      _
    $region38: #{ssm_white_con_forward.1} parent=5 // pred_check_branch
      %300 = sbr.rel (%p297) target = $region40
    $region39: #{ssm_white_con_forward.1} parent=5 // pred_region
      %s301 = ssub.s32 %s16, 1
      %p302 = pneg %p37
      %p303 = pneg %p34
      %p304 = pneg %p58
      %p305 = pneg %p55
      %p306 = pneg %p79
      %p307 = pneg %p76
      %p308 = pneg %p100
      %p309 = pneg %p97
      %p310 = scmp.lt.s32.totalorder %s21, 1
      %s311 = scalar_select %p310, %s21, 1
      %s312 = smul.addr %s311, 18
      %s313 = smul.addr %s312, 4
      %s314 = scalar_lea.vmem %s4, %s313
      %p315 = pneg %p126
      %p316 = pneg %p123
      %p317 = pneg %p152
      %p318 = pneg %p149
      %p319 = scmp.lt.s32.totalorder %s21, 1
      %s320 = scalar_select %p319, %s21, 1
      %s321 = smul.addr %s320, 4
      %s322 = smul.addr %s321, 4
      %s323 = scalar_lea.vmem %s5, %s322
      %p324 = pneg %p178
      %p325 = pneg %p175
      %p326 = scmp.lt.s32.totalorder %s21, 1
      %s327 = scalar_select %p326, %s21, 1
      %s328 = smul.addr %s327, 4
      %s329 = smul.addr %s328, 4
      %s330 = scalar_lea.vmem %s6, %s329
      %p331 = pneg %p204
      %p332 = pneg %p201
      %p333 = scmp.lt.s32.totalorder %s21, 1
      %s334 = scalar_select %p333, %s21, 1
      %s335 = smul.addr %s334, 4
      %s336 = smul.addr %s335, 4
      %s337 = scalar_lea.vmem %s7, %s336
      %p338 = pneg %p230
      %p339 = pneg %p227
      %p340 = scmp.lt.s32.totalorder %s21, 1
      %s341 = scalar_select %p340, %s21, 1
      %s342 = smul.addr %s341, 2
      %s343 = smul.addr %s342, 4
      %s344 = scalar_lea.vmem %s8, %s343
      %p345 = pneg %p256
      %p346 = pneg %p253
      %p347 = scmp.lt.s32.totalorder %s21, 1
      %s348 = scalar_select %p347, %s21, 1
      %s349 = smul.addr %s348, 2
      %s350 = smul.addr %s349, 4
      %s351 = scalar_lea.vmem %s9, %s350
      %p352 = scmp.lt.s32.totalorder %s21, 1
      %s353 = scalar_select %p352, %s21, 1
      %s354 = smul.addr %s353, 18
      %s355 = smul.addr %s354, 4
      %s356 = scalar_lea.vmem %s4, %s355
      %p357 = scmp.lt.s32.totalorder %s21, 1
      %s358 = scalar_select %p357, %s21, 1
      %s359 = smul.addr %s358, 4
      %s360 = smul.addr %s359, 4
      %s361 = scalar_lea.vmem %s5, %s360
      %p362 = scmp.lt.s32.totalorder %s21, 1
      %s363 = scalar_select %p362, %s21, 1
      %s364 = smul.addr %s363, 4
      %s365 = smul.addr %s364, 4
      %s366 = scalar_lea.vmem %s6, %s365
      %p367 = scmp.lt.s32.totalorder %s21, 1
      %s368 = scalar_select %p367, %s21, 1
      %s369 = smul.addr %s368, 4
      %s370 = smul.addr %s369, 4
      %s371 = scalar_lea.vmem %s7, %s370
      %p372 = scmp.lt.s32.totalorder %s21, 1
      %s373 = scalar_select %p372, %s21, 1
      %s374 = smul.addr %s373, 2
      %s375 = smul.addr %s374, 4
      %s376 = scalar_lea.vmem %s8, %s375
      %p377 = scmp.lt.s32.totalorder %s21, 1
      %s378 = scalar_select %p377, %s21, 1
      %s379 = smul.addr %s378, 2
      %s380 = smul.addr %s379, 4
      %s381 = scalar_lea.vmem %s9, %s380
      %p382 = scmp.eq.s32.totalorder %s21, 0
      // Predicated region
      $region41: #{ssm_white_con_forward.1} parent=39 // pred_check
        %p383 = pneg %p382
      $region42: #{ssm_white_con_forward.1} parent=39 // pred_check_branch
        %385 = sbr.rel (%p383) target = $region44
      $region43: #{ssm_white_con_forward.1} parent=39 // pred_region
        %v386 = vld [vmem:[%s0] sm:$0xf]
        %vm387 = vcmask 60416
        %388 = vst.msk [vmem:[#allocation2] sm:$0xf] %vm387, %v386
      $region44: #{ssm_white_con_forward.1} parent=39 // pred_fallthru
        _
      %v389 = vld [vmem:[%s356] sm:$0xff]
      %v390 = vld [vmem:[%s356 + $0x8] sm:$0xff]
      %v391 = vld [vmem:[%s356 + $0x10] sm:$0xff]
      %v392 = vld [vmem:[%s356 + $0x18] sm:$0xff]
      %v393 = vld [vmem:[%s356 + $0x20] sm:$0xff]
      %v394 = vld [vmem:[%s356 + $0x28] sm:$0xff]
      %v395 = vld [vmem:[%s356 + $0x30] sm:$0xff]
      %v396 = vld [vmem:[%s356 + $0x38] sm:$0xff]
      %v397 = vld [vmem:[%s356 + $0x40] sm:$0xff]
      %v398 = vmul.f32 %v389, 1.159151
      %v399 = vmul.f32 %v398, %v390
      %v400 = vld [vmem:[#allocation2] sm:$0xf]
      %v401 = vld [vmem:[%s1] sm:$0xff]
      %v402 = vld [vmem:[%s1 + $0x8] sm:$0xff]
      %v403 = vld [vmem:[%s1 + $0x10] sm:$0xff]
      %v404 = vld [vmem:[%s1 + $0x18] sm:$0xff]
      %v405 = vld [vmem:[%s2] sm:$0xff]
      %v406 = vld [vmem:[%s2 + $0x8] sm:$0xff]
      %v407 = vld [vmem:[%s2 + $0x10] sm:$0xff]
      %v408 = vld [vmem:[%s2 + $0x18] sm:$0xff]
      %v409 = vld [vmem:[%s2 + $0x20] sm:$0xff]
      %v410 = vld [vmem:[%s2 + $0x28] sm:$0xff]
      %v411 = vld [vmem:[%s2 + $0x30] sm:$0xff]
      %v412 = vld [vmem:[%s2 + $0x38] sm:$0xff]
      %v413 = vld [vmem:[%s2 + $0x40] sm:$0xff]
      %v414 = vld [vmem:[%s2 + $0x48] sm:$0xff]
      %v415 = vld [vmem:[%s2 + $0x50] sm:$0xff]
      %v416 = vld [vmem:[%s2 + $0x58] sm:$0xff]
      %v417 = vld [vmem:[%s2 + $0x60] sm:$0xff]
      %v418 = vld [vmem:[%s2 + $0x68] sm:$0xff]
      %v419 = vld [vmem:[%s2 + $0x70] sm:$0xff]
      %v420 = vld [vmem:[%s2 + $0x78] sm:$0xff]
      %v421 = vld [vmem:[%s2 + $0x80] sm:$0xff]
      %v422 = vld [vmem:[%s2 + $0x88] sm:$0xff]
      %v423 = vld [vmem:[%s2 + $0x90] sm:$0xff]
      %v424 = vld [vmem:[%s2 + $0x98] sm:$0xff]
      %v425 = vld [vmem:[%s2 + $0xa0] sm:$0xff]
      %v426 = vld [vmem:[%s2 + $0xa8] sm:$0xff]
      %v427 = vld [vmem:[%s2 + $0xb0] sm:$0xff]
      %v428 = vld [vmem:[%s2 + $0xb8] sm:$0xff]
      %v429 = vld [vmem:[%s2 + $0xc0] sm:$0xff]
      %v430 = vld [vmem:[%s2 + $0xc8] sm:$0xff]
      %v431 = vld [vmem:[%s2 + $0xd0] sm:$0xff]
      %v432 = vld [vmem:[%s2 + $0xd8] sm:$0xff]
      %v433 = vld [vmem:[%s2 + $0xe0] sm:$0xff]
      %v434 = vld [vmem:[%s2 + $0xe8] sm:$0xff]
      %v435 = vld [vmem:[%s2 + $0xf0] sm:$0xff]
      %v436 = vld [vmem:[%s2 + $0xf8] sm:$0xff]
      %v437 = vld [vmem:[%s2 + $0x100] sm:$0xff]
      %v438 = vld [vmem:[%s2 + $0x108] sm:$0xff]
      %v439 = vld [vmem:[%s2 + $0x110] sm:$0xff]
      %v440 = vld [vmem:[%s2 + $0x118] sm:$0xff]
      %v441 = vld [vmem:[%s2 + $0x120] sm:$0xff]
      %v442 = vld [vmem:[%s2 + $0x128] sm:$0xff]
      %v443 = vld [vmem:[%s2 + $0x130] sm:$0xff]
      %v444 = vld [vmem:[%s2 + $0x138] sm:$0xff]
      %v445 = vld [vmem:[%s2 + $0x140] sm:$0xff]
      %v446 = vld [vmem:[%s2 + $0x148] sm:$0xff]
      %v447 = vld [vmem:[%s2 + $0x150] sm:$0xff]
      %v448 = vld [vmem:[%s2 + $0x158] sm:$0xff]
      %v449 = vld [vmem:[%s2 + $0x160] sm:$0xff]
      %v450 = vld [vmem:[%s2 + $0x168] sm:$0xff]
      %v451 = vld [vmem:[%s2 + $0x170] sm:$0xff]
      %v452 = vld [vmem:[%s2 + $0x178] sm:$0xff]
      %v453 = vld [vmem:[%s2 + $0x180] sm:$0xff]
      %v454 = vld [vmem:[%s2 + $0x188] sm:$0xff]
      %v455 = vld [vmem:[%s2 + $0x190] sm:$0xff]
      %v456 = vld [vmem:[%s2 + $0x198] sm:$0xff]
      %v457 = vld [vmem:[%s2 + $0x1a0] sm:$0xff]
      %v458 = vld [vmem:[%s2 + $0x1a8] sm:$0xff]
      %v459 = vld [vmem:[%s2 + $0x1b0] sm:$0xff]
      %v460 = vld [vmem:[%s2 + $0x1b8] sm:$0xff]
      %v461 = vld [vmem:[%s2 + $0x1c0] sm:$0xff]
      %v462 = vld [vmem:[%s2 + $0x1c8] sm:$0xff]
      %v463 = vld [vmem:[%s2 + $0x1d0] sm:$0xff]
      %v464 = vld [vmem:[%s2 + $0x1d8] sm:$0xff]
      %v465 = vld [vmem:[%s2 + $0x1e0] sm:$0xff]
      %v466 = vld [vmem:[%s2 + $0x1e8] sm:$0xff]
      %v467 = vld [vmem:[%s2 + $0x1f0] sm:$0xff]
      %v468 = vld [vmem:[%s2 + $0x1f8] sm:$0xff]
      %v469 = vld [vmem:[%s2 + $0x200] sm:$0xff]
      %v470 = vld [vmem:[%s2 + $0x208] sm:$0xff]
      %v471 = vld [vmem:[%s2 + $0x210] sm:$0xff]
      %v472 = vld [vmem:[%s2 + $0x218] sm:$0xff]
      %v473 = vld [vmem:[%s2 + $0x220] sm:$0xff]
      %v474 = vld [vmem:[%s2 + $0x228] sm:$0xff]
      %v475 = vld [vmem:[%s2 + $0x230] sm:$0xff]
      %v476 = vld [vmem:[%s2 + $0x238] sm:$0xff]
      %v477 = vld [vmem:[%s2 + $0x240] sm:$0xff]
      %v478 = vld [vmem:[%s2 + $0x248] sm:$0xff]
      %v479 = vld [vmem:[%s2 + $0x250] sm:$0xff]
      %v480 = vld [vmem:[%s2 + $0x258] sm:$0xff]
      %v481 = vld [vmem:[%s2 + $0x260] sm:$0xff]
      %v482 = vld [vmem:[%s2 + $0x268] sm:$0xff]
      %v483 = vld [vmem:[%s2 + $0x270] sm:$0xff]
      %v484 = vld [vmem:[%s2 + $0x278] sm:$0xff]
      %v485 = vld [vmem:[%s2 + $0x280] sm:$0xff]
      %v486 = vld [vmem:[%s2 + $0x288] sm:$0xff]
      %v487 = vld [vmem:[%s2 + $0x290] sm:$0xff]
      %v488 = vld [vmem:[%s2 + $0x298] sm:$0xff]
      %v489 = vld [vmem:[%s2 + $0x2a0] sm:$0xff]
      %v490 = vld [vmem:[%s2 + $0x2a8] sm:$0xff]
      %v491 = vld [vmem:[%s2 + $0x2b0] sm:$0xff]
      %v492 = vld [vmem:[%s2 + $0x2b8] sm:$0xff]
      %v493 = vld [vmem:[%s2 + $0x2c0] sm:$0xff]
      %v494 = vld [vmem:[%s2 + $0x2c8] sm:$0xff]
      %v495 = vld [vmem:[%s2 + $0x2d0] sm:$0xff]
      %v496 = vld [vmem:[%s2 + $0x2d8] sm:$0xff]
      %v497 = vld [vmem:[%s2 + $0x2e0] sm:$0xff]
      %v498 = vld [vmem:[%s2 + $0x2e8] sm:$0xff]
      %v499 = vld [vmem:[%s2 + $0x2f0] sm:$0xff]
      %v500 = vld [vmem:[%s2 + $0x2f8] sm:$0xff]
      %v501 = vld [vmem:[%s2 + $0x300] sm:$0xff]
      %v502 = vld [vmem:[%s2 + $0x308] sm:$0xff]
      %v503 = vld [vmem:[%s2 + $0x310] sm:$0xff]
      %v504 = vld [vmem:[%s2 + $0x318] sm:$0xff]
      %v505 = vld [vmem:[%s2 + $0x320] sm:$0xff]
      %v506 = vld [vmem:[%s2 + $0x328] sm:$0xff]
      %v507 = vld [vmem:[%s2 + $0x330] sm:$0xff]
      %v508 = vld [vmem:[%s2 + $0x338] sm:$0xff]
      %v509 = vld [vmem:[%s2 + $0x340] sm:$0xff]
      %v510 = vld [vmem:[%s2 + $0x348] sm:$0xff]
      %v511 = vld [vmem:[%s2 + $0x350] sm:$0xff]
      %v512 = vld [vmem:[%s2 + $0x358] sm:$0xff]
      %v513 = vld [vmem:[%s2 + $0x360] sm:$0xff]
      %v514 = vld [vmem:[%s2 + $0x368] sm:$0xff]
      %v515 = vld [vmem:[%s2 + $0x370] sm:$0xff]
      %v516 = vld [vmem:[%s2 + $0x378] sm:$0xff]
      %v517 = vld [vmem:[%s2 + $0x380] sm:$0xff]
      %v518 = vld [vmem:[%s2 + $0x388] sm:$0xff]
      %v519 = vld [vmem:[%s2 + $0x390] sm:$0xff]
      %v520 = vld [vmem:[%s2 + $0x398] sm:$0xff]
      %v521 = vld [vmem:[%s2 + $0x3a0] sm:$0xff]
      %v522 = vld [vmem:[%s2 + $0x3a8] sm:$0xff]
      %v523 = vld [vmem:[%s2 + $0x3b0] sm:$0xff]
      %v524 = vld [vmem:[%s2 + $0x3b8] sm:$0xff]
      %v525 = vld [vmem:[%s2 + $0x3c0] sm:$0xff]
      %v526 = vld [vmem:[%s2 + $0x3c8] sm:$0xff]
      %v527 = vld [vmem:[%s2 + $0x3d0] sm:$0xff]
      %v528 = vld [vmem:[%s2 + $0x3d8] sm:$0xff]
      %v529 = vld [vmem:[%s2 + $0x3e0] sm:$0xff]
      %v530 = vld [vmem:[%s2 + $0x3e8] sm:$0xff]
      %v531 = vld [vmem:[%s2 + $0x3f0] sm:$0xff]
      %v532 = vld [vmem:[%s2 + $0x3f8] sm:$0xff]
      %534 = vst [vmem:[#allocation1] ss:$2 sm:$0xff] %v399
      %v535 = vld.sshfl [vmem:[#allocation1] sm:$0xff pattern:$0x75316420]
      %v536 = vld.sshfl [vmem:[#allocation1 + $0x8] sm:$0xff pattern:$0x75316420]
      %539 = vmatpush.msra.mxu0 %v465
      %540 = vmatpush.msra.mxu0 %v461
      %541 = vmatpush.msra.mxu0 %v457
      %542 = vmatpush.msra.mxu0 %v453
      %543 = vmatpush.msra.mxu0 %v449
      %544 = vmatpush.msra.mxu0 %v445
      %545 = vmatpush.msra.mxu0 %v441
      %546 = vmatpush.msra.mxu0 %v437
      %547 = vmatpush.msra.mxu0 %v433
      %548 = vmatpush.msra.mxu0 %v429
      %549 = vmatpush.msra.mxu0 %v425
      %550 = vmatpush.msra.mxu0 %v421
      %551 = vmatpush.msra.mxu0 %v417
      %552 = vmatpush.msra.mxu0 %v413
      %553 = vmatpush.msra.mxu0 %v409
      %554 = vmatpush.msra.mxu0 %v405
      %555 = vmatmul.f32.gmra.mxu0 %v535
      %v556 = vpop.f32.mrf.mxu0
      %v557 = vadd.f32 0.0, %v556
      %558 = vdwg.mxu0
      %559 = vmatpush.msra.mxu0 %v529
      %560 = vmatpush.msra.mxu0 %v525
      %561 = vmatpush.msra.mxu0 %v521
      %562 = vmatpush.msra.mxu0 %v517
      %563 = vmatpush.msra.mxu0 %v513
      %564 = vmatpush.msra.mxu0 %v509
      %565 = vmatpush.msra.mxu0 %v505
      %566 = vmatpush.msra.mxu0 %v501
      %567 = vmatpush.msra.mxu0 %v497
      %568 = vmatpush.msra.mxu0 %v493
      %569 = vmatpush.msra.mxu0 %v489
      %570 = vmatpush.msra.mxu0 %v485
      %571 = vmatpush.msra.mxu0 %v481
      %572 = vmatpush.msra.mxu0 %v477
      %573 = vmatpush.msra.mxu0 %v473
      %574 = vmatpush.msra.mxu0 %v469
      %575 = vmatmul.f32.gmra.mxu0 %v536
      %v576 = vpop.f32.mrf.mxu0
      %v577 = vadd.f32 %v557, %v576
      %578 = vdwg.mxu0
      %579 = vmatpush.msra.mxu0 %v466
      %580 = vmatpush.msra.mxu0 %v462
      %581 = vmatpush.msra.mxu0 %v458
      %582 = vmatpush.msra.mxu0 %v454
      %583 = vmatpush.msra.mxu0 %v450
      %584 = vmatpush.msra.mxu0 %v446
      %585 = vmatpush.msra.mxu0 %v442
      %586 = vmatpush.msra.mxu0 %v438
      %587 = vmatpush.msra.mxu0 %v434
      %588 = vmatpush.msra.mxu0 %v430
      %589 = vmatpush.msra.mxu0 %v426
      %590 = vmatpush.msra.mxu0 %v422
      %591 = vmatpush.msra.mxu0 %v418
      %592 = vmatpush.msra.mxu0 %v414
      %593 = vmatpush.msra.mxu0 %v410
      %594 = vmatpush.msra.mxu0 %v406
      %595 = vmatmul.f32.gmra.mxu0 %v535
      %v596 = vpop.f32.mrf.mxu0
      %v597 = vadd.f32 0.0, %v596
      %598 = vdwg.mxu0
      %599 = vmatpush.msra.mxu0 %v530
      %600 = vmatpush.msra.mxu0 %v526
      %601 = vmatpush.msra.mxu0 %v522
      %602 = vmatpush.msra.mxu0 %v518
      %603 = vmatpush.msra.mxu0 %v514
      %604 = vmatpush.msra.mxu0 %v510
      %605 = vmatpush.msra.mxu0 %v506
      %606 = vmatpush.msra.mxu0 %v502
      %607 = vmatpush.msra.mxu0 %v498
      %608 = vmatpush.msra.mxu0 %v494
      %609 = vmatpush.msra.mxu0 %v490
      %610 = vmatpush.msra.mxu0 %v486
      %611 = vmatpush.msra.mxu0 %v482
      %612 = vmatpush.msra.mxu0 %v478
      %613 = vmatpush.msra.mxu0 %v474
      %614 = vmatpush.msra.mxu0 %v470
      %615 = vmatmul.f32.gmra.mxu0 %v536
      %v616 = vpop.f32.mrf.mxu0
      %v617 = vadd.f32 %v597, %v616
      %618 = vdwg.mxu0
      %619 = vmatpush.msra.mxu0 %v467
      %620 = vmatpush.msra.mxu0 %v463
      %621 = vmatpush.msra.mxu0 %v459
      %622 = vmatpush.msra.mxu0 %v455
      %623 = vmatpush.msra.mxu0 %v451
      %624 = vmatpush.msra.mxu0 %v447
      %625 = vmatpush.msra.mxu0 %v443
      %626 = vmatpush.msra.mxu0 %v439
      %627 = vmatpush.msra.mxu0 %v435
      %628 = vmatpush.msra.mxu0 %v431
      %629 = vmatpush.msra.mxu0 %v427
      %630 = vmatpush.msra.mxu0 %v423
      %631 = vmatpush.msra.mxu0 %v419
      %632 = vmatpush.msra.mxu0 %v415
      %633 = vmatpush.msra.mxu0 %v411
      %634 = vmatpush.msra.mxu0 %v407
      %635 = vmatmul.f32.gmra.mxu0 %v535
      %v636 = vpop.f32.mrf.mxu0
      %v637 = vadd.f32 0.0, %v636
      %638 = vdwg.mxu0
      %639 = vmatpush.msra.mxu0 %v531
      %640 = vmatpush.msra.mxu0 %v527
      %641 = vmatpush.msra.mxu0 %v523
      %642 = vmatpush.msra.mxu0 %v519
      %643 = vmatpush.msra.mxu0 %v515
      %644 = vmatpush.msra.mxu0 %v511
      %645 = vmatpush.msra.mxu0 %v507
      %646 = vmatpush.msra.mxu0 %v503
      %647 = vmatpush.msra.mxu0 %v499
      %648 = vmatpush.msra.mxu0 %v495
      %649 = vmatpush.msra.mxu0 %v491
      %650 = vmatpush.msra.mxu0 %v487
      %651 = vmatpush.msra.mxu0 %v483
      %652 = vmatpush.msra.mxu0 %v479
      %653 = vmatpush.msra.mxu0 %v475
      %654 = vmatpush.msra.mxu0 %v471
      %655 = vmatmul.f32.gmra.mxu0 %v536
      %v656 = vpop.f32.mrf.mxu0
      %v657 = vadd.f32 %v637, %v656
      %658 = vdwg.mxu0
      %659 = vmatpush.msra.mxu0 %v468
      %660 = vmatpush.msra.mxu0 %v464
      %661 = vmatpush.msra.mxu0 %v460
      %662 = vmatpush.msra.mxu0 %v456
      %663 = vmatpush.msra.mxu0 %v452
      %664 = vmatpush.msra.mxu0 %v448
      %665 = vmatpush.msra.mxu0 %v444
      %666 = vmatpush.msra.mxu0 %v440
      %667 = vmatpush.msra.mxu0 %v436
      %668 = vmatpush.msra.mxu0 %v432
      %669 = vmatpush.msra.mxu0 %v428
      %670 = vmatpush.msra.mxu0 %v424
      %671 = vmatpush.msra.mxu0 %v420
      %672 = vmatpush.msra.mxu0 %v416
      %673 = vmatpush.msra.mxu0 %v412
      %674 = vmatpush.msra.mxu0 %v408
      %675 = vmatmul.f32.gmra.mxu0 %v535
      %v676 = vpop.f32.mrf.mxu0
      %v677 = vadd.f32 0.0, %v676
      %678 = vdwg.mxu0
      %679 = vmatpush.msra.mxu0 %v532
      %680 = vmatpush.msra.mxu0 %v528
      %681 = vmatpush.msra.mxu0 %v524
      %682 = vmatpush.msra.mxu0 %v520
      %683 = vmatpush.msra.mxu0 %v516
      %684 = vmatpush.msra.mxu0 %v512
      %685 = vmatpush.msra.mxu0 %v508
      %686 = vmatpush.msra.mxu0 %v504
      %687 = vmatpush.msra.mxu0 %v500
      %688 = vmatpush.msra.mxu0 %v496
      %689 = vmatpush.msra.mxu0 %v492
      %690 = vmatpush.msra.mxu0 %v488
      %691 = vmatpush.msra.mxu0 %v484
      %692 = vmatpush.msra.mxu0 %v480
      %693 = vmatpush.msra.mxu0 %v476
      %694 = vmatpush.msra.mxu0 %v472
      %695 = vmatmul.f32.gmra.mxu0 %v536
      %v696 = vpop.f32.mrf.mxu0
      %v697 = vadd.f32 %v677, %v696
      %698 = vdwg.mxu0
      %vm699 = vcmask 64512
      %v701 = vsel %vm699, %v400, 0
      %703 = vmatpush.msra.mxu0 0.0
      %704 = vmatpush.msra.mxu0 0.0
      %705 = vmatpush.msra.mxu0 0.0
      %706 = vmatpush.msra.mxu0 0.0
      %707 = vmatpush.msra.mxu0 0.0
      %708 = vmatpush.msra.mxu0 0.0
      %709 = vmatpush.msra.mxu0 0.0
      %710 = vmatpush.msra.mxu0 0.0
      %711 = vmatpush.msra.mxu0 0.0
      %712 = vmatpush.msra.mxu0 0.0
      %713 = vmatpush.msra.mxu0 0.0
      %714 = vmatpush.msra.mxu0 0.0
      %715 = vmatpush.msra.mxu0 0.0
      %716 = vmatpush.msra.mxu0 0.0
      %717 = vmatpush.msra.mxu0 0.0
      %718 = vmatpush.msra.mxu0 %v401
      %719 = vmatmul.f32.gmra.mxu0 %v701
      %v720 = vpop.f32.mrf.mxu0
      %v721 = vadd.f32 %v577, %v720
      %722 = vdwg.mxu0
      %723 = vmatpush.msra.mxu0 0.0
      %724 = vmatpush.msra.mxu0 0.0
      %725 = vmatpush.msra.mxu0 0.0
      %726 = vmatpush.msra.mxu0 0.0
      %727 = vmatpush.msra.mxu0 0.0
      %728 = vmatpush.msra.mxu0 0.0
      %729 = vmatpush.msra.mxu0 0.0
      %730 = vmatpush.msra.mxu0 0.0
      %731 = vmatpush.msra.mxu0 0.0
      %732 = vmatpush.msra.mxu0 0.0
      %733 = vmatpush.msra.mxu0 0.0
      %734 = vmatpush.msra.mxu0 0.0
      %735 = vmatpush.msra.mxu0 0.0
      %736 = vmatpush.msra.mxu0 0.0
      %737 = vmatpush.msra.mxu0 0.0
      %738 = vmatpush.msra.mxu0 %v402
      %739 = vmatmul.f32.gmra.mxu0 %v701
      %v740 = vpop.f32.mrf.mxu0
      %v741 = vadd.f32 %v617, %v740
      %742 = vdwg.mxu0
      %743 = vmatpush.msra.mxu0 0.0
      %744 = vmatpush.msra.mxu0 0.0
      %745 = vmatpush.msra.mxu0 0.0
      %746 = vmatpush.msra.mxu0 0.0
      %747 = vmatpush.msra.mxu0 0.0
      %748 = vmatpush.msra.mxu0 0.0
      %749 = vmatpush.msra.mxu0 0.0
      %750 = vmatpush.msra.mxu0 0.0
      %751 = vmatpush.msra.mxu0 0.0
      %752 = vmatpush.msra.mxu0 0.0
      %753 = vmatpush.msra.mxu0 0.0
      %754 = vmatpush.msra.mxu0 0.0
      %755 = vmatpush.msra.mxu0 0.0
      %756 = vmatpush.msra.mxu0 0.0
      %757 = vmatpush.msra.mxu0 0.0
      %758 = vmatpush.msra.mxu0 %v403
      %759 = vmatmul.f32.gmra.mxu0 %v701
      %v760 = vpop.f32.mrf.mxu0
      %v761 = vadd.f32 %v657, %v760
      %762 = vdwg.mxu0
      %763 = vmatpush.msra.mxu0 0.0
      %764 = vmatpush.msra.mxu0 0.0
      %765 = vmatpush.msra.mxu0 0.0
      %766 = vmatpush.msra.mxu0 0.0
      %767 = vmatpush.msra.mxu0 0.0
      %768 = vmatpush.msra.mxu0 0.0
      %769 = vmatpush.msra.mxu0 0.0
      %770 = vmatpush.msra.mxu0 0.0
      %771 = vmatpush.msra.mxu0 0.0
      %772 = vmatpush.msra.mxu0 0.0
      %773 = vmatpush.msra.mxu0 0.0
      %774 = vmatpush.msra.mxu0 0.0
      %775 = vmatpush.msra.mxu0 0.0
      %776 = vmatpush.msra.mxu0 0.0
      %777 = vmatpush.msra.mxu0 0.0
      %778 = vmatpush.msra.mxu0 %v404
      %779 = vmatmul.f32.gmra.mxu0 %v701
      %v780 = vpop.f32.mrf.mxu0
      %v781 = vadd.f32 %v697, %v780
      %782 = vdwg.mxu0
      %v783 = vld [vmem:[%s3] sm:$0xff]
      %v784 = vld [vmem:[%s3 + $0x8] sm:$0xff]
      %v785 = vld [vmem:[%s3 + $0x10] sm:$0xff]
      %v786 = vld [vmem:[%s3 + $0x18] sm:$0xff]
      %v787 = vld [vmem:[%s3 + $0x20] sm:$0xff]
      %v788 = vld [vmem:[%s3 + $0x28] sm:$0xff]
      %v789 = vld [vmem:[%s3 + $0x30] sm:$0xff]
      %v790 = vld [vmem:[%s3 + $0x38] sm:$0xff]
      %v791 = vld [vmem:[%s3 + $0x40] sm:$0xff]
      %v792 = vld [vmem:[%s3 + $0x48] sm:$0xff]
      %v793 = vld [vmem:[%s3 + $0x50] sm:$0xff]
      %v794 = vld [vmem:[%s3 + $0x58] sm:$0xff]
      %v795 = vld [vmem:[%s3 + $0x60] sm:$0xff]
      %v796 = vld [vmem:[%s3 + $0x68] sm:$0xff]
      %v797 = vld [vmem:[%s3 + $0x70] sm:$0xff]
      %v798 = vld [vmem:[%s3 + $0x78] sm:$0xff]
      %v799 = vld [vmem:[%s3 + $0x80] sm:$0xff]
      %v800 = vld [vmem:[%s3 + $0x88] sm:$0xff]
      %v801 = vld [vmem:[%s3 + $0x90] sm:$0xff]
      %v802 = vld [vmem:[%s3 + $0x98] sm:$0xff]
      %v803 = vld [vmem:[%s3 + $0xa0] sm:$0xff]
      %v804 = vld [vmem:[%s3 + $0xa8] sm:$0xff]
      %v805 = vld [vmem:[%s3 + $0xb0] sm:$0xff]
      %v806 = vld [vmem:[%s3 + $0xb8] sm:$0xff]
      %v807 = vld [vmem:[%s3 + $0xc0] sm:$0xff]
      %v808 = vld [vmem:[%s3 + $0xc8] sm:$0xff]
      %v809 = vld [vmem:[%s3 + $0xd0] sm:$0xff]
      %v810 = vld [vmem:[%s3 + $0xd8] sm:$0xff]
      %v811 = vld [vmem:[%s3 + $0xe0] sm:$0xff]
      %v812 = vld [vmem:[%s3 + $0xe8] sm:$0xff]
      %v813 = vld [vmem:[%s3 + $0xf0] sm:$0xff]
      %v814 = vld [vmem:[%s3 + $0xf8] sm:$0xff]
      %v815 = vld [vmem:[%s3 + $0x100] sm:$0xff]
      %v816 = vld [vmem:[%s3 + $0x108] sm:$0xff]
      %v817 = vld [vmem:[%s3 + $0x110] sm:$0xff]
      %v818 = vld [vmem:[%s3 + $0x118] sm:$0xff]
      %v819 = vld [vmem:[%s3 + $0x120] sm:$0xff]
      %v820 = vld [vmem:[%s3 + $0x128] sm:$0xff]
      %v821 = vld [vmem:[%s3 + $0x130] sm:$0xff]
      %v822 = vld [vmem:[%s3 + $0x138] sm:$0xff]
      %v823 = vld [vmem:[%s3 + $0x140] sm:$0xff]
      %v824 = vld [vmem:[%s3 + $0x148] sm:$0xff]
      %v825 = vld [vmem:[%s3 + $0x150] sm:$0xff]
      %v826 = vld [vmem:[%s3 + $0x158] sm:$0xff]
      %v827 = vld [vmem:[%s3 + $0x160] sm:$0xff]
      %v828 = vld [vmem:[%s3 + $0x168] sm:$0xff]
      %v829 = vld [vmem:[%s3 + $0x170] sm:$0xff]
      %v830 = vld [vmem:[%s3 + $0x178] sm:$0xff]
      %v831 = vld [vmem:[%s3 + $0x180] sm:$0xff]
      %v832 = vld [vmem:[%s3 + $0x188] sm:$0xff]
      %v833 = vld [vmem:[%s3 + $0x190] sm:$0xff]
      %v834 = vld [vmem:[%s3 + $0x198] sm:$0xff]
      %v835 = vld [vmem:[%s3 + $0x1a0] sm:$0xff]
      %v836 = vld [vmem:[%s3 + $0x1a8] sm:$0xff]
      %v837 = vld [vmem:[%s3 + $0x1b0] sm:$0xff]
      %v838 = vld [vmem:[%s3 + $0x1b8] sm:$0xff]
      %v839 = vld [vmem:[%s3 + $0x1c0] sm:$0xff]
      %v840 = vld [vmem:[%s3 + $0x1c8] sm:$0xff]
      %v841 = vld [vmem:[%s3 + $0x1d0] sm:$0xff]
      %v842 = vld [vmem:[%s3 + $0x1d8] sm:$0xff]
      %v843 = vld [vmem:[%s3 + $0x1e0] sm:$0xff]
      %v844 = vld [vmem:[%s3 + $0x1e8] sm:$0xff]
      %v845 = vld [vmem:[%s3 + $0x1f0] sm:$0xff]
      %v846 = vld [vmem:[%s3 + $0x1f8] sm:$0xff]
      %v847 = vld [vmem:[%s3 + $0x200] sm:$0xff]
      %v848 = vld [vmem:[%s3 + $0x208] sm:$0xff]
      %v849 = vld [vmem:[%s3 + $0x210] sm:$0xff]
      %v850 = vld [vmem:[%s3 + $0x218] sm:$0xff]
      %v851 = vld [vmem:[%s3 + $0x220] sm:$0xff]
      %v852 = vld [vmem:[%s3 + $0x228] sm:$0xff]
      %v853 = vld [vmem:[%s3 + $0x230] sm:$0xff]
      %v854 = vld [vmem:[%s3 + $0x238] sm:$0xff]
      %v855 = vld [vmem:[%s3 + $0x240] sm:$0xff]
      %v856 = vld [vmem:[%s3 + $0x248] sm:$0xff]
      %v857 = vld [vmem:[%s3 + $0x250] sm:$0xff]
      %v858 = vld [vmem:[%s3 + $0x258] sm:$0xff]
      %v859 = vld [vmem:[%s3 + $0x260] sm:$0xff]
      %v860 = vld [vmem:[%s3 + $0x268] sm:$0xff]
      %v861 = vld [vmem:[%s3 + $0x270] sm:$0xff]
      %v862 = vld [vmem:[%s3 + $0x278] sm:$0xff]
      %v863 = vld [vmem:[%s3 + $0x280] sm:$0xff]
      %v864 = vld [vmem:[%s3 + $0x288] sm:$0xff]
      %v865 = vld [vmem:[%s3 + $0x290] sm:$0xff]
      %v866 = vld [vmem:[%s3 + $0x298] sm:$0xff]
      %v867 = vld [vmem:[%s3 + $0x2a0] sm:$0xff]
      %v868 = vld [vmem:[%s3 + $0x2a8] sm:$0xff]
      %v869 = vld [vmem:[%s3 + $0x2b0] sm:$0xff]
      %v870 = vld [vmem:[%s3 + $0x2b8] sm:$0xff]
      %v871 = vld [vmem:[%s3 + $0x2c0] sm:$0xff]
      %v872 = vld [vmem:[%s3 + $0x2c8] sm:$0xff]
      %v873 = vld [vmem:[%s3 + $0x2d0] sm:$0xff]
      %v874 = vld [vmem:[%s3 + $0x2d8] sm:$0xff]
      %v875 = vld [vmem:[%s3 + $0x2e0] sm:$0xff]
      %v876 = vld [vmem:[%s3 + $0x2e8] sm:$0xff]
      %v877 = vld [vmem:[%s3 + $0x2f0] sm:$0xff]
      %v878 = vld [vmem:[%s3 + $0x2f8] sm:$0xff]
      %v879 = vld [vmem:[%s3 + $0x300] sm:$0xff]
      %v880 = vld [vmem:[%s3 + $0x308] sm:$0xff]
      %v881 = vld [vmem:[%s3 + $0x310] sm:$0xff]
      %v882 = vld [vmem:[%s3 + $0x318] sm:$0xff]
      %v883 = vld [vmem:[%s3 + $0x320] sm:$0xff]
      %v884 = vld [vmem:[%s3 + $0x328] sm:$0xff]
      %v885 = vld [vmem:[%s3 + $0x330] sm:$0xff]
      %v886 = vld [vmem:[%s3 + $0x338] sm:$0xff]
      %v887 = vld [vmem:[%s3 + $0x340] sm:$0xff]
      %v888 = vld [vmem:[%s3 + $0x348] sm:$0xff]
      %v889 = vld [vmem:[%s3 + $0x350] sm:$0xff]
      %v890 = vld [vmem:[%s3 + $0x358] sm:$0xff]
      %v891 = vld [vmem:[%s3 + $0x360] sm:$0xff]
      %v892 = vld [vmem:[%s3 + $0x368] sm:$0xff]
      %v893 = vld [vmem:[%s3 + $0x370] sm:$0xff]
      %v894 = vld [vmem:[%s3 + $0x378] sm:$0xff]
      %v895 = vld [vmem:[%s3 + $0x380] sm:$0xff]
      %v896 = vld [vmem:[%s3 + $0x388] sm:$0xff]
      %v897 = vld [vmem:[%s3 + $0x390] sm:$0xff]
      %v898 = vld [vmem:[%s3 + $0x398] sm:$0xff]
      %v899 = vld [vmem:[%s3 + $0x3a0] sm:$0xff]
      %v900 = vld [vmem:[%s3 + $0x3a8] sm:$0xff]
      %v901 = vld [vmem:[%s3 + $0x3b0] sm:$0xff]
      %v902 = vld [vmem:[%s3 + $0x3b8] sm:$0xff]
      %v903 = vld [vmem:[%s3 + $0x3c0] sm:$0xff]
      %v904 = vld [vmem:[%s3 + $0x3c8] sm:$0xff]
      %v905 = vld [vmem:[%s3 + $0x3d0] sm:$0xff]
      %v906 = vld [vmem:[%s3 + $0x3d8] sm:$0xff]
      %v907 = vld [vmem:[%s3 + $0x3e0] sm:$0xff]
      %v908 = vld [vmem:[%s3 + $0x3e8] sm:$0xff]
      %v909 = vld [vmem:[%s3 + $0x3f0] sm:$0xff]
      %v910 = vld [vmem:[%s3 + $0x3f8] sm:$0xff]
      %912 = vst [vmem:[#allocation1] ss:$2 sm:$0xff] %v391
      %v913 = vld.sshfl [vmem:[#allocation1] sm:$0xff pattern:$0x75316420]
      %v914 = vld.sshfl [vmem:[#allocation1 + $0x8] sm:$0xff pattern:$0x75316420]
      %917 = vmatpush.msra.mxu0 %v843
      %918 = vmatpush.msra.mxu0 %v839
      %919 = vmatpush.msra.mxu0 %v835
      %920 = vmatpush.msra.mxu0 %v831
      %921 = vmatpush.msra.mxu0 %v827
      %922 = vmatpush.msra.mxu0 %v823
      %923 = vmatpush.msra.mxu0 %v819
      %924 = vmatpush.msra.mxu0 %v815
      %925 = vmatpush.msra.mxu0 %v811
      %926 = vmatpush.msra.mxu0 %v807
      %927 = vmatpush.msra.mxu0 %v803
      %928 = vmatpush.msra.mxu0 %v799
      %929 = vmatpush.msra.mxu0 %v795
      %930 = vmatpush.msra.mxu0 %v791
      %931 = vmatpush.msra.mxu0 %v787
      %932 = vmatpush.msra.mxu0 %v783
      %933 = vmatmul.f32.gmra.mxu0 %v913
      %v934 = vpop.f32.mrf.mxu0
      %v935 = vadd.f32 0.0, %v934
      %936 = vdwg.mxu0
      %937 = vmatpush.msra.mxu0 %v907
      %938 = vmatpush.msra.mxu0 %v903
      %939 = vmatpush.msra.mxu0 %v899
      %940 = vmatpush.msra.mxu0 %v895
      %941 = vmatpush.msra.mxu0 %v891
      %942 = vmatpush.msra.mxu0 %v887
      %943 = vmatpush.msra.mxu0 %v883
      %944 = vmatpush.msra.mxu0 %v879
      %945 = vmatpush.msra.mxu0 %v875
      %946 = vmatpush.msra.mxu0 %v871
      %947 = vmatpush.msra.mxu0 %v867
      %948 = vmatpush.msra.mxu0 %v863
      %949 = vmatpush.msra.mxu0 %v859
      %950 = vmatpush.msra.mxu0 %v855
      %951 = vmatpush.msra.mxu0 %v851
      %952 = vmatpush.msra.mxu0 %v847
      %953 = vmatmul.f32.gmra.mxu0 %v914
      %v954 = vpop.f32.mrf.mxu0
      %v955 = vadd.f32 %v935, %v954
      %956 = vdwg.mxu0
      %957 = vmatpush.msra.mxu0 %v844
      %958 = vmatpush.msra.mxu0 %v840
      %959 = vmatpush.msra.mxu0 %v836
      %960 = vmatpush.msra.mxu0 %v832
      %961 = vmatpush.msra.mxu0 %v828
      %962 = vmatpush.msra.mxu0 %v824
      %963 = vmatpush.msra.mxu0 %v820
      %964 = vmatpush.msra.mxu0 %v816
      %965 = vmatpush.msra.mxu0 %v812
      %966 = vmatpush.msra.mxu0 %v808
      %967 = vmatpush.msra.mxu0 %v804
      %968 = vmatpush.msra.mxu0 %v800
      %969 = vmatpush.msra.mxu0 %v796
      %970 = vmatpush.msra.mxu0 %v792
      %971 = vmatpush.msra.mxu0 %v788
      %972 = vmatpush.msra.mxu0 %v784
      %973 = vmatmul.f32.gmra.mxu0 %v913
      %v974 = vpop.f32.mrf.mxu0
      %v975 = vadd.f32 0.0, %v974
      %976 = vdwg.mxu0
      %977 = vmatpush.msra.mxu0 %v908
      %978 = vmatpush.msra.mxu0 %v904
      %979 = vmatpush.msra.mxu0 %v900
      %980 = vmatpush.msra.mxu0 %v896
      %981 = vmatpush.msra.mxu0 %v892
      %982 = vmatpush.msra.mxu0 %v888
      %983 = vmatpush.msra.mxu0 %v884
      %984 = vmatpush.msra.mxu0 %v880
      %985 = vmatpush.msra.mxu0 %v876
      %986 = vmatpush.msra.mxu0 %v872
      %987 = vmatpush.msra.mxu0 %v868
      %988 = vmatpush.msra.mxu0 %v864
      %989 = vmatpush.msra.mxu0 %v860
      %990 = vmatpush.msra.mxu0 %v856
      %991 = vmatpush.msra.mxu0 %v852
      %992 = vmatpush.msra.mxu0 %v848
      %993 = vmatmul.f32.gmra.mxu0 %v914
      %v994 = vpop.f32.mrf.mxu0
      %v995 = vadd.f32 %v975, %v994
      %996 = vdwg.mxu0
      %997 = vmatpush.msra.mxu0 %v845
      %998 = vmatpush.msra.mxu0 %v841
      %999 = vmatpush.msra.mxu0 %v837
      %1000 = vmatpush.msra.mxu0 %v833
      %1001 = vmatpush.msra.mxu0 %v829
      %1002 = vmatpush.msra.mxu0 %v825
      %1003 = vmatpush.msra.mxu0 %v821
      %1004 = vmatpush.msra.mxu0 %v817
      %1005 = vmatpush.msra.mxu0 %v813
      %1006 = vmatpush.msra.mxu0 %v809
      %1007 = vmatpush.msra.mxu0 %v805
      %1008 = vmatpush.msra.mxu0 %v801
      %1009 = vmatpush.msra.mxu0 %v797
      %1010 = vmatpush.msra.mxu0 %v793
      %1011 = vmatpush.msra.mxu0 %v789
      %1012 = vmatpush.msra.mxu0 %v785
      %1013 = vmatmul.f32.gmra.mxu0 %v913
      %v1014 = vpop.f32.mrf.mxu0
      %v1015 = vadd.f32 0.0, %v1014
      %1016 = vdwg.mxu0
      %1017 = vmatpush.msra.mxu0 %v909
      %1018 = vmatpush.msra.mxu0 %v905
      %1019 = vmatpush.msra.mxu0 %v901
      %1020 = vmatpush.msra.mxu0 %v897
      %1021 = vmatpush.msra.mxu0 %v893
      %1022 = vmatpush.msra.mxu0 %v889
      %1023 = vmatpush.msra.mxu0 %v885
      %1024 = vmatpush.msra.mxu0 %v881
      %1025 = vmatpush.msra.mxu0 %v877
      %1026 = vmatpush.msra.mxu0 %v873
      %1027 = vmatpush.msra.mxu0 %v869
      %1028 = vmatpush.msra.mxu0 %v865
      %1029 = vmatpush.msra.mxu0 %v861
      %1030 = vmatpush.msra.mxu0 %v857
      %1031 = vmatpush.msra.mxu0 %v853
      %1032 = vmatpush.msra.mxu0 %v849
      %1033 = vmatmul.f32.gmra.mxu0 %v914
      %v1034 = vpop.f32.mrf.mxu0
      %v1035 = vadd.f32 %v1015, %v1034
      %1036 = vdwg.mxu0
      %1037 = vmatpush.msra.mxu0 %v846
      %1038 = vmatpush.msra.mxu0 %v842
      %1039 = vmatpush.msra.mxu0 %v838
      %1040 = vmatpush.msra.mxu0 %v834
      %1041 = vmatpush.msra.mxu0 %v830
      %1042 = vmatpush.msra.mxu0 %v826
      %1043 = vmatpush.msra.mxu0 %v822
      %1044 = vmatpush.msra.mxu0 %v818
      %1045 = vmatpush.msra.mxu0 %v814
      %1046 = vmatpush.msra.mxu0 %v810
      %1047 = vmatpush.msra.mxu0 %v806
      %1048 = vmatpush.msra.mxu0 %v802
      %1049 = vmatpush.msra.mxu0 %v798
      %1050 = vmatpush.msra.mxu0 %v794
      %1051 = vmatpush.msra.mxu0 %v790
      %1052 = vmatpush.msra.mxu0 %v786
      %1053 = vmatmul.f32.gmra.mxu0 %v913
      %v1054 = vpop.f32.mrf.mxu0
      %v1055 = vadd.f32 0.0, %v1054
      %1056 = vdwg.mxu0
      %1057 = vmatpush.msra.mxu0 %v910
      %1058 = vmatpush.msra.mxu0 %v906
      %1059 = vmatpush.msra.mxu0 %v902
      %1060 = vmatpush.msra.mxu0 %v898
      %1061 = vmatpush.msra.mxu0 %v894
      %1062 = vmatpush.msra.mxu0 %v890
      %1063 = vmatpush.msra.mxu0 %v886
      %1064 = vmatpush.msra.mxu0 %v882
      %1065 = vmatpush.msra.mxu0 %v878
      %1066 = vmatpush.msra.mxu0 %v874
      %1067 = vmatpush.msra.mxu0 %v870
      %1068 = vmatpush.msra.mxu0 %v866
      %1069 = vmatpush.msra.mxu0 %v862
      %1070 = vmatpush.msra.mxu0 %v858
      %1071 = vmatpush.msra.mxu0 %v854
      %1072 = vmatpush.msra.mxu0 %v850
      %1073 = vmatmul.f32.gmra.mxu0 %v914
      %v1074 = vpop.f32.mrf.mxu0
      %v1075 = vadd.f32 %v1055, %v1074
      %1076 = vdwg.mxu0
      %v1077 = vadd.f32 %v721, %v955
      %v1078 = vadd.f32 %v741, %v995
      %v1079 = vadd.f32 %v761, %v1035
      %v1080 = vadd.f32 %v781, %v1075
      %1082 = vrot.lane.b32.xlu0 %v1080, 8
      %v1083 = vpop.permute.xlu0 %1082
      %vm1085 = vcmask 60416
      %1086 = vst.msk [vmem:[#allocation2] sm:$0xf] %vm1085, %v1083
      %v1090 = vrot.slane %v1078, 4
      %v1091 = vrot.slane %v1080, 4
      %vm1092 = vcmask 1043456
      %v1093 = vsel %vm1092, %v1077, %v1090
      %v1094 = vsel %vm1092, %v1079, %v1091
      %1097 = vst [vmem:[%s361] sm:$0xff] %v1093
      %1098 = vst [vmem:[%s361 + $0x8] sm:$0xff] %v1094
      %v1099 = vsub.f32 %v392, %v1093
      %v1100 = vsub.f32 %v393, %v1094
      %v1101 = vmax.f32 %v1099, 0.0
      %v1102 = vmax.f32 %v1100, 0.0
      %1103 = vst [vmem:[%s366] sm:$0xff] %v1101
      %1104 = vst [vmem:[%s366 + $0x8] sm:$0xff] %v1102
      %1107 = vst [vmem:[#allocation1] ss:$2 sm:$0xff] %v394
      %s1108 = scalar_lea.vmem [#allocation1], 16
      %1109 = vst [vmem:[%s1108] ss:$2 sm:$0xff] %v395
      %v1110 = vld.sshfl [vmem:[#allocation1] sm:$0xff pattern:$0x75316420]
      %v1111 = vld.sshfl [vmem:[#allocation1 + $0x8] sm:$0xff pattern:$0x75316420]
      %v1112 = vld.sshfl [vmem:[#allocation1 + $0x10] sm:$0xff pattern:$0x75316420]
      %v1113 = vld.sshfl [vmem:[#allocation1 + $0x18] sm:$0xff pattern:$0x75316420]
      %v1118 = vsub.f32 %v1077, %v1110
      %v1119 = vsub.f32 %v1078, %v1111
      %v1120 = vsub.f32 %v1079, %v1112
      %v1121 = vsub.f32 %v1080, %v1113
      %v1122 = vmax.f32 %v1118, 0.0
      %v1123 = vmax.f32 %v1119, 0.0
      %v1124 = vmax.f32 %v1120, 0.0
      %v1125 = vmax.f32 %v1121, 0.0
      %v1130 = vrot.slane %v1123, 4
      %v1131 = vrot.slane %v1125, 4
      %v1132 = vsel %vm1092, %v1122, %v1130
      %v1133 = vsel %vm1092, %v1124, %v1131
      %1136 = vst [vmem:[%s371] sm:$0xff] %v1132
      %1137 = vst [vmem:[%s371 + $0x8] sm:$0xff] %v1133
      %v1138 = vsub.f32 %v396, %v399
      %v1139 = vmax.f32 %v1138, 0.0
      %1140 = vst [vmem:[%s376] sm:$0xff] %v1139
      %v1141 = vsub.f32 %v399, %v397
      %v1142 = vmax.f32 %v1141, 0.0
      %1143 = vst [vmem:[%s381] sm:$0xff] %v1142
      %p1144 = scmp.lt.s32.totalorder %s21, 1
      %s1145 = scalar_select %p1144, %s21, 1
      %s1146 = smul.addr %s1145, 4
      %s1147 = smul.addr %s1146, 4
      %s1148 = scalar_lea.vmem %s5, %s1147
      %p1149 = scmp.lt.s32.totalorder %s21, 1
      %s1150 = scalar_select %p1149, %s21, 1
      %s1151 = smul.addr %s1150, 4
      %s1152 = smul.addr %s1151, 4
      %s1153 = scalar_lea.vmem %s6, %s1152
      %p1154 = scmp.lt.s32.totalorder %s21, 1
      %s1155 = scalar_select %p1154, %s21, 1
      %s1156 = smul.addr %s1155, 4
      %s1157 = smul.addr %s1156, 4
      %s1158 = scalar_lea.vmem %s7, %s1157
      %p1159 = scmp.lt.s32.totalorder %s21, 1
      %s1160 = scalar_select %p1159, %s21, 1
      %s1161 = smul.addr %s1160, 2
      %s1162 = smul.addr %s1161, 4
      %s1163 = scalar_lea.vmem %s8, %s1162
      %p1164 = scmp.lt.s32.totalorder %s21, 1
      %s1165 = scalar_select %p1164, %s21, 1
      %s1166 = smul.addr %s1165, 2
      %s1167 = smul.addr %s1166, 4
      %s1168 = scalar_lea.vmem %s9, %s1167
      // Predicated region
      $region45: #{ssm_white_con_forward.1} parent=39 // pred_check
        %p1169 = pneg %p149
      $region46: #{ssm_white_con_forward.1} parent=39 // pred_check_branch
        %1171 = sbr.rel (%p1169) target = $region48
      $region47: #{ssm_white_con_forward.1} parent=39 // pred_region
        _
      $region48: #{ssm_white_con_forward.1} parent=39 // pred_fallthru
        _
      // Predicated region
      $region49: #{ssm_white_con_forward.1} parent=39 // pred_check
        %p1172 = pneg %p175
      $region50: #{ssm_white_con_forward.1} parent=39 // pred_check_branch
        %1174 = sbr.rel (%p1172) target = $region52
      $region51: #{ssm_white_con_forward.1} parent=39 // pred_region
        _
      $region52: #{ssm_white_con_forward.1} parent=39 // pred_fallthru
        _
      // Predicated region
      $region53: #{ssm_white_con_forward.1} parent=39 // pred_check
        %p1175 = pneg %p201
      $region54: #{ssm_white_con_forward.1} parent=39 // pred_check_branch
        %1177 = sbr.rel (%p1175) target = $region56
      $region55: #{ssm_white_con_forward.1} parent=39 // pred_region
        _
      $region56: #{ssm_white_con_forward.1} parent=39 // pred_fallthru
        _
      // Predicated region
      $region57: #{ssm_white_con_forward.1} parent=39 // pred_check
        %p1178 = pneg %p227
      $region58: #{ssm_white_con_forward.1} parent=39 // pred_check_branch
        %1180 = sbr.rel (%p1178) target = $region60
      $region59: #{ssm_white_con_forward.1} parent=39 // pred_region
        _
      $region60: #{ssm_white_con_forward.1} parent=39 // pred_fallthru
        _
      // Predicated region
      $region61: #{ssm_white_con_forward.1} parent=39 // pred_check
        %p1181 = pneg %p253
      $region62: #{ssm_white_con_forward.1} parent=39 // pred_check_branch
        %1183 = sbr.rel (%p1181) target = $region64
      $region63: #{ssm_white_con_forward.1} parent=39 // pred_region
        _
      $region64: #{ssm_white_con_forward.1} parent=39 // pred_fallthru
        _
    $region40: #{ssm_white_con_forward.1} parent=5 // pred_fallthru
      _
    %p1184 = scmp.le.s32.totalorder 2, %s16
    // Predicated region
    $region65: #{ssm_white_con_forward.1} parent=5 // pred_check
      %p1185 = pneg %p1184
    $region66: #{ssm_white_con_forward.1} parent=5 // pred_check_branch
      %1187 = sbr.rel (%p1185) target = $region68
    $region67: #{ssm_white_con_forward.1} parent=5 // pred_region
      %s1188 = ssub.s32 %s16, 2
      // Predicated region
      $region69: #{ssm_white_con_forward.1} parent=67 // pred_check
        %p1189 = pneg %p155
      $region70: #{ssm_white_con_forward.1} parent=67 // pred_check_branch
        %1191 = sbr.rel (%p1189) target = $region72
      $region71: #{ssm_white_con_forward.1} parent=67 // pred_region
        %p1192 = scmp.lt.s32.totalorder %s22, 1
        %s1193 = scalar_select %p1192, %s22, 1
        %s1194 = smul.addr %s1193, 4
        %s1195 = smul.addr %s1194, 4
        %s1196 = scalar_lea.vmem %s5, %s1195
      $region72: #{ssm_white_con_forward.1} parent=67 // pred_fallthru
        _
      // Predicated region
      $region73: #{ssm_white_con_forward.1} parent=67 // pred_check
        %p1197 = pneg %p181
      $region74: #{ssm_white_con_forward.1} parent=67 // pred_check_branch
        %1199 = sbr.rel (%p1197) target = $region76
      $region75: #{ssm_white_con_forward.1} parent=67 // pred_region
        %p1200 = scmp.lt.s32.totalorder %s22, 1
        %s1201 = scalar_select %p1200, %s22, 1
        %s1202 = smul.addr %s1201, 4
        %s1203 = smul.addr %s1202, 4
        %s1204 = scalar_lea.vmem %s6, %s1203
      $region76: #{ssm_white_con_forward.1} parent=67 // pred_fallthru
        _
      // Predicated region
      $region77: #{ssm_white_con_forward.1} parent=67 // pred_check
        %p1205 = pneg %p207
      $region78: #{ssm_white_con_forward.1} parent=67 // pred_check_branch
        %1207 = sbr.rel (%p1205) target = $region80
      $region79: #{ssm_white_con_forward.1} parent=67 // pred_region
        %p1208 = scmp.lt.s32.totalorder %s22, 1
        %s1209 = scalar_select %p1208, %s22, 1
        %s1210 = smul.addr %s1209, 4
        %s1211 = smul.addr %s1210, 4
        %s1212 = scalar_lea.vmem %s7, %s1211
      $region80: #{ssm_white_con_forward.1} parent=67 // pred_fallthru
        _
      // Predicated region
      $region81: #{ssm_white_con_forward.1} parent=67 // pred_check
        %p1213 = pneg %p233
      $region82: #{ssm_white_con_forward.1} parent=67 // pred_check_branch
        %1215 = sbr.rel (%p1213) target = $region84
      $region83: #{ssm_white_con_forward.1} parent=67 // pred_region
        %p1216 = scmp.lt.s32.totalorder %s22, 1
        %s1217 = scalar_select %p1216, %s22, 1
        %s1218 = smul.addr %s1217, 2
        %s1219 = smul.addr %s1218, 4
        %s1220 = scalar_lea.vmem %s8, %s1219
      $region84: #{ssm_white_con_forward.1} parent=67 // pred_fallthru
        _
      // Predicated region
      $region85: #{ssm_white_con_forward.1} parent=67 // pred_check
        %p1221 = pneg %p259
      $region86: #{ssm_white_con_forward.1} parent=67 // pred_check_branch
        %1223 = sbr.rel (%p1221) target = $region88
      $region87: #{ssm_white_con_forward.1} parent=67 // pred_region
        %p1224 = scmp.lt.s32.totalorder %s22, 1
        %s1225 = scalar_select %p1224, %s22, 1
        %s1226 = smul.addr %s1225, 2
        %s1227 = smul.addr %s1226, 4
        %s1228 = scalar_lea.vmem %s9, %s1227
      $region88: #{ssm_white_con_forward.1} parent=67 // pred_fallthru
        _
    $region68: #{ssm_white_con_forward.1} parent=5 // pred_fallthru
      _
  $region6: #{ssm_white_con_forward.1} parent=0 // loop_footer
    %s20 = sadd.s32 1, %s16
  $region7: #{ssm_white_con_forward.1} parent=0 // loop_footer_branch
    %15 = sbr.rel target = $region3
  $region8: #{ssm_white_con_forward.1} parent=0 // loop_exit
    _

</llo_original>
